<compile_context>
chip_gen: v6e
topology: v6e:2x2x1
jax: 0.10.0
libtpu: 0.0.40
codegen_flags: <defaults>
</compile_context>

<pallas_src>
import jax
import jax.numpy as jnp
from jax.experimental import pallas as pl
from jax.experimental.pallas import tpu as pltpu


def _largest_divisor(n, cap):
    """Largest divisor of n that is <= cap (falls back to 1)."""
    d = min(n, cap)
    while n % d != 0:
        d -= 1
    return d


# ----------------------------------------------------------------------------
# Tiled matmul + bias:  (M, K) @ (K, N) + (1, N) -> (M, N)
# Used for (a) the hoisted per-layer input projection and (b) the final linear.
# ----------------------------------------------------------------------------
def _matmul_bias_kernel(x_ref, w_ref, b_ref, o_ref, acc_ref):
    k = pl.program_id(2)

    @pl.when(k == 0)
    def _():
        acc_ref[...] = jnp.zeros_like(acc_ref)

    acc_ref[...] += jnp.dot(x_ref[...], w_ref[...],
                            preferred_element_type=jnp.float32)

    @pl.when(k == pl.num_programs(2) - 1)
    def _():
        o_ref[...] = acc_ref[...] + b_ref[...]


def matmul_bias(x, w, b, *, tm=256, tk=512, tn=512):
    """x: (M, K) f32, w: (K, N) f32, b: (1, N) f32 -> (M, N) f32."""
    M, K = x.shape
    _, N = w.shape
    tm = _largest_divisor(M, tm)
    tk = _largest_divisor(K, tk)
    tn = _largest_divisor(N, tn)
    grid = (M // tm, N // tn, K // tk)
    return pl.pallas_call(
        _matmul_bias_kernel,
        out_shape=jax.ShapeDtypeStruct((M, N), jnp.float32),
        grid_spec=pltpu.PrefetchScalarGridSpec(
            num_scalar_prefetch=0,
            grid=grid,
            in_specs=[
                pl.BlockSpec((tm, tk), lambda i, j, k: (i, k)),
                pl.BlockSpec((tk, tn), lambda i, j, k: (k, j)),
                pl.BlockSpec((1, tn), lambda i, j, k: (0, j)),
            ],
            out_specs=pl.BlockSpec((tm, tn), lambda i, j, k: (i, j)),
            scratch_shapes=[pltpu.VMEM((tm, tn), jnp.float32)],
        ),
        compiler_params=pltpu.CompilerParams(
            dimension_semantics=("parallel", "parallel", "arbitrary")),
    )(x, w, b)


# ----------------------------------------------------------------------------
# Recurrent LSTM kernel: only the h @ W_hh^T term lives inside the serial loop.
# Grid iterates over chunks of Tc timesteps; h/c persist in VMEM scratch.
# ----------------------------------------------------------------------------
def _lstm_rec_kernel(gx_ref, h0_ref, c0_ref, whh_ref,
                     y_ref, hT_ref, cT_ref, h_sc, c_sc):
    t_blk = pl.program_id(0)

    @pl.when(t_blk == 0)
    def _():
        h_sc[...] = h0_ref[...]
        c_sc[...] = c0_ref[...]

    H = h_sc.shape[-1]
    Tc = gx_ref.shape[0]
    whh = whh_ref[...]                      # hoisted: load W_hh^T once per chunk

    def step(i, carry):
        # Only the recurrent matmul is serially dependent.
        gates = gx_ref[i] + jnp.dot(h_sc[...], whh,
                                    preferred_element_type=jnp.float32)
        # NOTE: with H not a multiple of 128 these slices cut inside a lane
        # group; for lane-aligned H pack gates as (B, 4, H) blocks instead.
        i_g = jax.nn.sigmoid(gates[:, 0 * H:1 * H])
        f_g = jax.nn.sigmoid(gates[:, 1 * H:2 * H])
        g_g = jnp.tanh(gates[:, 2 * H:3 * H])
        o_g = jax.nn.sigmoid(gates[:, 3 * H:4 * H])

        c_new = f_g * c_sc[...] + i_g * g_g
        h_new = o_g * jnp.tanh(c_new)

        c_sc[...] = c_new
        h_sc[...] = h_new
        y_ref[i] = h_new
        return carry

    jax.lax.fori_loop(0, Tc, step, 0, unroll=True)

    @pl.when(t_blk == pl.num_programs(0) - 1)
    def _():
        hT_ref[...] = h_sc[...]
        cT_ref[...] = c_sc[...]


def lstm_recurrence(gates_x, h0, c0, w_hh, *, tc_cap=16):
    """gates_x: (T, B, 4H) precomputed x-projection (+bias).
    Returns y (T, B, H), h_T (B, H), c_T (B, H)."""
    T, B, H4 = gates_x.shape
    H = h0.shape[-1]
    whh_t = jnp.transpose(w_hh)                      # (H, 4H)
    Tc = _largest_divisor(T, tc_cap)

    y, hT, cT = pl.pallas_call(
        _lstm_rec_kernel,
        out_shape=(jax.ShapeDtypeStruct((T, B, H), jnp.float32),
                   jax.ShapeDtypeStruct((B, H), jnp.float32),
                   jax.ShapeDtypeStruct((B, H), jnp.float32)),
        grid_spec=pltpu.PrefetchScalarGridSpec(
            num_scalar_prefetch=0,
            grid=(T // Tc,),
            in_specs=[
                pl.BlockSpec((Tc, B, 4 * H), lambda t: (t, 0, 0)),   # gates_x chunk
                pl.BlockSpec((B, H), lambda t: (0, 0)),              # h0
                pl.BlockSpec((B, H), lambda t: (0, 0)),              # c0
                pl.BlockSpec((H, 4 * H), lambda t: (0, 0)),          # W_hh^T
            ],
            out_specs=[
                pl.BlockSpec((Tc, B, H), lambda t: (t, 0, 0)),       # Y chunk
                pl.BlockSpec((B, H), lambda t: (0, 0)),              # h_T
                pl.BlockSpec((B, H), lambda t: (0, 0)),              # c_T
            ],
            scratch_shapes=[pltpu.VMEM((B, H), jnp.float32),         # h carry
                            pltpu.VMEM((B, H), jnp.float32)],        # c carry
        ),
        compiler_params=pltpu.CompilerParams(
            dimension_semantics=("arbitrary",)),                     # sequential recurrence
    )(gates_x, h0, c0, whh_t)
    return y, hT, cT


# ----------------------------------------------------------------------------
# Full Model.forward
# ----------------------------------------------------------------------------
def model_forward(params, inputs, state, vocab_size):
    """inputs: (B, T) int tokens; state: (h, c) each (num_layers, B, H)."""
    tokens_T = inputs.T.astype(jnp.int32)            # (T, B)
    h0_all, c0_all = state
    num_layers = h0_all.shape[0]
    T, B = tokens_T.shape
    H = h0_all.shape[-1]

    h_finals, c_finals = [], []
    x = None
    for layer in range(num_layers):
        w_ih, w_hh, b_ih, b_hh = params["lstm"][layer]
        wih_t = jnp.transpose(w_ih)                  # (D_in, 4H)
        bias = (b_ih + b_hh).reshape(1, 4 * H)

        if layer == 0:
            # one_hot(token) @ W_ih^T  ==  gather row `token` of W_ih^T.
            # (glue in plain JAX; avoids the (T,B,V) one-hot tensor entirely)
            gates_x = jnp.take(wih_t, tokens_T, axis=0) + bias       # (T, B, 4H)
        else:
            gx = matmul_bias(x.reshape(T * B, H), wih_t, bias)       # (T*B, 4H)
            gates_x = gx.reshape(T, B, 4 * H)

        x, hT, cT = lstm_recurrence(gates_x, h0_all[layer], c0_all[layer], w_hh)
        h_finals.append(hT)
        c_finals.append(cT)

    y_flat = x.reshape(T * B, H)
    out = matmul_bias(y_flat, jnp.transpose(params["linear_w"]),
                      params["linear_b"].reshape(1, -1))             # (T*B, V)
    return out, (jnp.stack(h_finals), jnp.stack(c_finals))


# ----------------------------------------------------------------------------
# Pure-JAX reference (for correctness check only)
# ----------------------------------------------------------------------------
def _ref_lstm_layer(x, h0, c0, w_ih, w_hh, b_ih, b_hh):
    def step(carry, xt):
        h, c = carry
        gates = xt @ w_ih.T + h @ w_hh.T + b_ih + b_hh
        i, f, g, o = jnp.split(gates, 4, axis=-1)
        i, f, o = jax.nn.sigmoid(i), jax.nn.sigmoid(f), jax.nn.sigmoid(o)
        g = jnp.tanh(g)
        c = f * c + i * g
        h = o * jnp.tanh(c)
        return (h, c), h
    (hT, cT), ys = jax.lax.scan(step, (h0, c0), x)
    return ys, hT, cT


def _ref_forward(params, inputs, state, vocab_size):
    X = jax.nn.one_hot(inputs.T, vocab_size, dtype=jnp.float32)
    h0_all, c0_all = state
    x = X
    hs, cs = [], []
    for layer in range(h0_all.shape[0]):
        w_ih, w_hh, b_ih, b_hh = params["lstm"][layer]
        x, hT, cT = _ref_lstm_layer(x, h0_all[layer], c0_all[layer],
                                    w_ih, w_hh, b_ih, b_hh)
        hs.append(hT)
        cs.append(cT)
    T, B, H = x.shape
    out = x.reshape(T * B, H) @ params["linear_w"].T + params["linear_b"]
    return out, (jnp.stack(hs), jnp.stack(cs))


# ----------------------------------------------------------------------------
# Deterministic parameter init (PyTorch-style uniform(-1/sqrt(H), 1/sqrt(H)))
# ----------------------------------------------------------------------------
def init_params(key, vocab_size, num_hiddens, num_layers):
    bound = 1.0 / jnp.sqrt(num_hiddens)
    params = {"lstm": []}
    for layer in range(num_layers):
        d_in = vocab_size if layer == 0 else num_hiddens
        key, k1, k2, k3, k4 = jax.random.split(key, 5)
        w_ih = jax.random.uniform(k1, (4 * num_hiddens, d_in), jnp.float32, -bound, bound)
        w_hh = jax.random.uniform(k2, (4 * num_hiddens, num_hiddens), jnp.float32, -bound, bound)
        b_ih = jax.random.uniform(k3, (4 * num_hiddens,), jnp.float32, -bound, bound)
        b_hh = jax.random.uniform(k4, (4 * num_hiddens,), jnp.float32, -bound, bound)
        params["lstm"].append((w_ih, w_hh, b_ih, b_hh))
    key, k5, k6 = jax.random.split(key, 3)
    params["linear_w"] = jax.random.uniform(k5, (vocab_size, num_hiddens), jnp.float32, -bound, bound)
    params["linear_b"] = jax.random.uniform(k6, (vocab_size,), jnp.float32, -bound, bound)
    return params


def begin_state(num_layers, batch_size, num_hiddens):
    shape = (num_layers, batch_size, num_hiddens)
    return (jnp.zeros(shape, jnp.float32), jnp.zeros(shape, jnp.float32))


if __name__ == "__main__":
    VOCAB, HIDDEN, LAYERS = 32, 32, 2
    BATCH, SEQ = 2, 8

    key = jax.random.PRNGKey(0)
    key, pk, ik = jax.random.split(key, 3)
    params = init_params(pk, VOCAB, HIDDEN, LAYERS)
    inputs = jax.random.randint(ik, (BATCH, SEQ), 0, VOCAB, dtype=jnp.int32)
    state = begin_state(LAYERS, BATCH, HIDDEN)

    out, (h_out, c_out) = model_forward(params, inputs, state, VOCAB)
    out = jax.block_until_ready(out)
    h_out = jax.block_until_ready(h_out)
    c_out = jax.block_until_ready(c_out)

    # sanity check against pure-JAX reference
    ref_out, (ref_h, ref_c) = _ref_forward(params, inputs, state, VOCAB)
    assert out.shape == (SEQ * BATCH, VOCAB)
    assert h_out.shape == (LAYERS, BATCH, HIDDEN)
    assert jnp.allclose(out, ref_out, atol=1e-5), "output mismatch"
    assert jnp.allclose(h_out, ref_h, atol=1e-5), "h state mismatch"
    assert jnp.allclose(c_out, ref_c, atol=1e-5), "c state mismatch"

    print("KERNEL_OK")
</pallas_src>

<mosaic_0001>
module attributes {stable_mosaic.version = 11 : i64} {
  func.func @_lstm_rec_kernel(%arg0: i32, %arg1: memref<8x2x128xf32, #tpu.memory_space<vmem>>, %arg2: memref<2x32xf32, #tpu.memory_space<vmem>>, %arg3: memref<2x32xf32, #tpu.memory_space<vmem>>, %arg4: memref<32x128xf32, #tpu.memory_space<vmem>>, %arg5: memref<8x2x32xf32, #tpu.memory_space<vmem>>, %arg6: memref<2x32xf32, #tpu.memory_space<vmem>>, %arg7: memref<2x32xf32, #tpu.memory_space<vmem>>, %arg8: memref<2x32xf32, #tpu.memory_space<vmem>>, %arg9: memref<2x32xf32, #tpu.memory_space<vmem>>) attributes {dimension_semantics = [#tpu.dimension_semantics<arbitrary>], iteration_bounds = array<i64: 1>, scalar_prefetch = 0 : i64, scratch_operands = 2 : i64, tpu.core_type = #tpu.core_type<tc>, window_params = [{transform_indices = @transform_0, window_bounds = array<i64: 8, 2, 128>}, {pipeline_mode = #tpu.pipeline_mode<synchronous>, transform_indices = @transform_1, window_bounds = array<i64: 2, 32>}, {pipeline_mode = #tpu.pipeline_mode<synchronous>, transform_indices = @transform_2, window_bounds = array<i64: 2, 32>}, {pipeline_mode = #tpu.pipeline_mode<synchronous>, transform_indices = @transform_3, window_bounds = array<i64: 32, 128>}, {transform_indices = @transform_4, window_bounds = array<i64: 8, 2, 32>}, {pipeline_mode = #tpu.pipeline_mode<synchronous>, transform_indices = @transform_5, window_bounds = array<i64: 2, 32>}, {pipeline_mode = #tpu.pipeline_mode<synchronous>, transform_indices = @transform_6, window_bounds = array<i64: 2, 32>}]} {
    %c0_i32 = arith.constant 0 : i32
    %0 = arith.cmpi eq, %arg0, %c0_i32 : i32
    %1 = arith.extui %0 : i1 to i32
    %c0_i32_0 = arith.constant 0 : i32
    %2 = arith.cmpi ne, %1, %c0_i32_0 : i32
    scf.if %2 {
      %c0_132 = arith.constant 0 : index
      %c0_133 = arith.constant 0 : index
      %311 = vector.load %arg2[%c0_132, %c0_133] : memref<2x32xf32, #tpu.memory_space<vmem>>, vector<2x32xf32>
      %c0_134 = arith.constant 0 : index
      %c0_135 = arith.constant 0 : index
      %312 = vector.load %arg8[%c0_134, %c0_135] : memref<2x32xf32, #tpu.memory_space<vmem>>, vector<2x32xf32>
      tpu.vector_store %arg8[%c0_134, %c0_135], %311 {strides = array<i32>} : memref<2x32xf32, #tpu.memory_space<vmem>>, vector<2x32xf32>,
      %c0_136 = arith.constant 0 : index
      %c0_137 = arith.constant 0 : index
      %313 = vector.load %arg3[%c0_136, %c0_137] : memref<2x32xf32, #tpu.memory_space<vmem>>, vector<2x32xf32>
      %c0_138 = arith.constant 0 : index
      %c0_139 = arith.constant 0 : index
      %314 = vector.load %arg9[%c0_138, %c0_139] : memref<2x32xf32, #tpu.memory_space<vmem>>, vector<2x32xf32>
      tpu.vector_store %arg9[%c0_138, %c0_139], %313 {strides = array<i32>} : memref<2x32xf32, #tpu.memory_space<vmem>>, vector<2x32xf32>,
    } else {
    }
    %c0 = arith.constant 0 : index
    %c0_1 = arith.constant 0 : index
    %3 = vector.load %arg4[%c0, %c0_1] : memref<32x128xf32, #tpu.memory_space<vmem>>, vector<32x128xf32>
    %c0_i32_2 = arith.constant 0 : i32
    %4 = arith.index_cast %c0_i32_2 : i32 to index
    %c0_3 = arith.constant 0 : index
    %c0_4 = arith.constant 0 : index
    %5 = vector.load %arg1[%4, %c0_3, %c0_4] : memref<8x2x128xf32, #tpu.memory_space<vmem>>, vector<1x2x128xf32>
    %6 = vector.shape_cast %5 : vector<1x2x128xf32> to vector<2x128xf32>
    %c0_5 = arith.constant 0 : index
    %c0_6 = arith.constant 0 : index
    %7 = vector.load %arg8[%c0_5, %c0_6] : memref<2x32xf32, #tpu.memory_space<vmem>>, vector<2x32xf32>
    %cst = arith.constant dense<0.000000e+00> : vector<2x128xf32>
    %8 = tpu.matmul %7, %3, %cst {dimension_numbers = #tpu.dot_dimension_numbers<[1], [0], [0], [1], [0, 0, 1, 1], [], []>} : vector<2x32xf32>, vector<32x128xf32>, vector<2x128xf32> -> vector<2x128xf32>
    %9 = arith.addf %6, %8 : vector<2x128xf32>
    %10 = vector.extract_strided_slice %9 {offsets = [0, 0], sizes = [2, 32], strides = [1, 1]} : vector<2x128xf32> to vector<2x32xf32>
    %11 = arith.negf %10 : vector<2x32xf32>
    %12 = math.exp %11 : vector<2x32xf32>
    %cst_7 = arith.constant 1.000000e+00 : f32
    %13 = vector.broadcast %cst_7 : f32 to vector<2x32xf32>
    %14 = arith.addf %13, %12 : vector<2x32xf32>
    %15 = arith.divf %13, %14 : vector<2x32xf32>
    %16 = vector.extract_strided_slice %9 {offsets = [0, 32], sizes = [2, 32], strides = [1, 1]} : vector<2x128xf32> to vector<2x32xf32>
    %17 = arith.negf %16 : vector<2x32xf32>
    %18 = math.exp %17 : vector<2x32xf32>
    %cst_8 = arith.constant 1.000000e+00 : f32
    %19 = vector.broadcast %cst_8 : f32 to vector<2x32xf32>
    %20 = arith.addf %19, %18 : vector<2x32xf32>
    %21 = arith.divf %19, %20 : vector<2x32xf32>
    %22 = vector.extract_strided_slice %9 {offsets = [0, 64], sizes = [2, 32], strides = [1, 1]} : vector<2x128xf32> to vector<2x32xf32>
    %23 = math.tanh %22 : vector<2x32xf32>
    %24 = vector.extract_strided_slice %9 {offsets = [0, 96], sizes = [2, 32], strides = [1, 1]} : vector<2x128xf32> to vector<2x32xf32>
    %25 = arith.negf %24 : vector<2x32xf32>
    %26 = math.exp %25 : vector<2x32xf32>
    %cst_9 = arith.constant 1.000000e+00 : f32
    %27 = vector.broadcast %cst_9 : f32 to vector<2x32xf32>
    %28 = arith.addf %27, %26 : vector<2x32xf32>
    %29 = arith.divf %27, %28 : vector<2x32xf32>
    %c0_10 = arith.constant 0 : index
    %c0_11 = arith.constant 0 : index
    %30 = vector.load %arg9[%c0_10, %c0_11] : memref<2x32xf32, #tpu.memory_space<vmem>>, vector<2x32xf32>
    %31 = arith.mulf %21, %30 : vector<2x32xf32>
    %32 = arith.mulf %15, %23 : vector<2x32xf32>
    %33 = arith.addf %31, %32 : vector<2x32xf32>
    %34 = math.tanh %33 : vector<2x32xf32>
    %35 = arith.mulf %29, %34 : vector<2x32xf32>
    %c0_12 = arith.constant 0 : index
    %c0_13 = arith.constant 0 : index
    %36 = vector.load %arg9[%c0_12, %c0_13] : memref<2x32xf32, #tpu.memory_space<vmem>>, vector<2x32xf32>
    tpu.vector_store %arg9[%c0_12, %c0_13], %33 {strides = array<i32>} : memref<2x32xf32, #tpu.memory_space<vmem>>, vector<2x32xf32>,
    %c0_14 = arith.constant 0 : index
    %c0_15 = arith.constant 0 : index
    %37 = vector.load %arg8[%c0_14, %c0_15] : memref<2x32xf32, #tpu.memory_space<vmem>>, vector<2x32xf32>
    tpu.vector_store %arg8[%c0_14, %c0_15], %35 {strides = array<i32>} : memref<2x32xf32, #tpu.memory_space<vmem>>, vector<2x32xf32>,
    %38 = arith.index_cast %c0_i32_2 : i32 to index
    %c0_16 = arith.constant 0 : index
    %c0_17 = arith.constant 0 : index
    %39 = vector.load %arg5[%38, %c0_16, %c0_17] : memref<8x2x32xf32, #tpu.memory_space<vmem>>, vector<1x2x32xf32>
    %40 = vector.shape_cast %39 : vector<1x2x32xf32> to vector<2x32xf32>
    %41 = vector.shape_cast %35 : vector<2x32xf32> to vector<1x2x32xf32>
    tpu.vector_store %arg5[%38, %c0_16, %c0_17], %41 {strides = array<i32>} : memref<8x2x32xf32, #tpu.memory_space<vmem>>, vector<1x2x32xf32>,
    %c1_i32 = arith.constant 1 : i32
    %42 = arith.index_cast %c1_i32 : i32 to index
    %c0_18 = arith.constant 0 : index
    %c0_19 = arith.constant 0 : index
    %43 = vector.load %arg1[%42, %c0_18, %c0_19] : memref<8x2x128xf32, #tpu.memory_space<vmem>>, vector<1x2x128xf32>
    %44 = vector.shape_cast %43 : vector<1x2x128xf32> to vector<2x128xf32>
    %c0_20 = arith.constant 0 : index
    %c0_21 = arith.constant 0 : index
    %45 = vector.load %arg8[%c0_20, %c0_21] : memref<2x32xf32, #tpu.memory_space<vmem>>, vector<2x32xf32>
    %cst_22 = arith.constant dense<0.000000e+00> : vector<2x128xf32>
    %46 = tpu.matmul %45, %3, %cst_22 {dimension_numbers = #tpu.dot_dimension_numbers<[1], [0], [0], [1], [0, 0, 1, 1], [], []>} : vector<2x32xf32>, vector<32x128xf32>, vector<2x128xf32> -> vector<2x128xf32>
    %47 = arith.addf %44, %46 : vector<2x128xf32>
    %48 = vector.extract_strided_slice %47 {offsets = [0, 0], sizes = [2, 32], strides = [1, 1]} : vector<2x128xf32> to vector<2x32xf32>
    %49 = arith.negf %48 : vector<2x32xf32>
    %50 = math.exp %49 : vector<2x32xf32>
    %cst_23 = arith.constant 1.000000e+00 : f32
    %51 = vector.broadcast %cst_23 : f32 to vector<2x32xf32>
    %52 = arith.addf %51, %50 : vector<2x32xf32>
    %53 = arith.divf %51, %52 : vector<2x32xf32>
    %54 = vector.extract_strided_slice %47 {offsets = [0, 32], sizes = [2, 32], strides = [1, 1]} : vector<2x128xf32> to vector<2x32xf32>
    %55 = arith.negf %54 : vector<2x32xf32>
    %56 = math.exp %55 : vector<2x32xf32>
    %cst_24 = arith.constant 1.000000e+00 : f32
    %57 = vector.broadcast %cst_24 : f32 to vector<2x32xf32>
    %58 = arith.addf %57, %56 : vector<2x32xf32>
    %59 = arith.divf %57, %58 : vector<2x32xf32>
    %60 = vector.extract_strided_slice %47 {offsets = [0, 64], sizes = [2, 32], strides = [1, 1]} : vector<2x128xf32> to vector<2x32xf32>
    %61 = math.tanh %60 : vector<2x32xf32>
    %62 = vector.extract_strided_slice %47 {offsets = [0, 96], sizes = [2, 32], strides = [1, 1]} : vector<2x128xf32> to vector<2x32xf32>
    %63 = arith.negf %62 : vector<2x32xf32>
    %64 = math.exp %63 : vector<2x32xf32>
    %cst_25 = arith.constant 1.000000e+00 : f32
    %65 = vector.broadcast %cst_25 : f32 to vector<2x32xf32>
    %66 = arith.addf %65, %64 : vector<2x32xf32>
    %67 = arith.divf %65, %66 : vector<2x32xf32>
    %c0_26 = arith.constant 0 : index
    %c0_27 = arith.constant 0 : index
    %68 = vector.load %arg9[%c0_26, %c0_27] : memref<2x32xf32, #tpu.memory_space<vmem>>, vector<2x32xf32>
    %69 = arith.mulf %59, %68 : vector<2x32xf32>
    %70 = arith.mulf %53, %61 : vector<2x32xf32>
    %71 = arith.addf %69, %70 : vector<2x32xf32>
    %72 = math.tanh %71 : vector<2x32xf32>
    %73 = arith.mulf %67, %72 : vector<2x32xf32>
    %c0_28 = arith.constant 0 : index
    %c0_29 = arith.constant 0 : index
    %74 = vector.load %arg9[%c0_28, %c0_29] : memref<2x32xf32, #tpu.memory_space<vmem>>, vector<2x32xf32>
    tpu.vector_store %arg9[%c0_28, %c0_29], %71 {strides = array<i32>} : memref<2x32xf32, #tpu.memory_space<vmem>>, vector<2x32xf32>,
    %c0_30 = arith.constant 0 : index
    %c0_31 = arith.constant 0 : index
    %75 = vector.load %arg8[%c0_30, %c0_31] : memref<2x32xf32, #tpu.memory_space<vmem>>, vector<2x32xf32>
    tpu.vector_store %arg8[%c0_30, %c0_31], %73 {strides = array<i32>} : memref<2x32xf32, #tpu.memory_space<vmem>>, vector<2x32xf32>,
    %76 = arith.index_cast %c1_i32 : i32 to index
    %c0_32 = arith.constant 0 : index
    %c0_33 = arith.constant 0 : index
    %77 = vector.load %arg5[%76, %c0_32, %c0_33] : memref<8x2x32xf32, #tpu.memory_space<vmem>>, vector<1x2x32xf32>
    %78 = vector.shape_cast %77 : vector<1x2x32xf32> to vector<2x32xf32>
    %79 = vector.shape_cast %73 : vector<2x32xf32> to vector<1x2x32xf32>
    tpu.vector_store %arg5[%76, %c0_32, %c0_33], %79 {strides = array<i32>} : memref<8x2x32xf32, #tpu.memory_space<vmem>>, vector<1x2x32xf32>,
    %c2_i32 = arith.constant 2 : i32
    %80 = arith.index_cast %c2_i32 : i32 to index
    %c0_34 = arith.constant 0 : index
    %c0_35 = arith.constant 0 : index
    %81 = vector.load %arg1[%80, %c0_34, %c0_35] : memref<8x2x128xf32, #tpu.memory_space<vmem>>, vector<1x2x128xf32>
    %82 = vector.shape_cast %81 : vector<1x2x128xf32> to vector<2x128xf32>
    %c0_36 = arith.constant 0 : index
    %c0_37 = arith.constant 0 : index
    %83 = vector.load %arg8[%c0_36, %c0_37] : memref<2x32xf32, #tpu.memory_space<vmem>>, vector<2x32xf32>
    %cst_38 = arith.constant dense<0.000000e+00> : vector<2x128xf32>
    %84 = tpu.matmul %83, %3, %cst_38 {dimension_numbers = #tpu.dot_dimension_numbers<[1], [0], [0], [1], [0, 0, 1, 1], [], []>} : vector<2x32xf32>, vector<32x128xf32>, vector<2x128xf32> -> vector<2x128xf32>
    %85 = arith.addf %82, %84 : vector<2x128xf32>
    %86 = vector.extract_strided_slice %85 {offsets = [0, 0], sizes = [2, 32], strides = [1, 1]} : vector<2x128xf32> to vector<2x32xf32>
    %87 = arith.negf %86 : vector<2x32xf32>
    %88 = math.exp %87 : vector<2x32xf32>
    %cst_39 = arith.constant 1.000000e+00 : f32
    %89 = vector.broadcast %cst_39 : f32 to vector<2x32xf32>
    %90 = arith.addf %89, %88 : vector<2x32xf32>
    %91 = arith.divf %89, %90 : vector<2x32xf32>
    %92 = vector.extract_strided_slice %85 {offsets = [0, 32], sizes = [2, 32], strides = [1, 1]} : vector<2x128xf32> to vector<2x32xf32>
    %93 = arith.negf %92 : vector<2x32xf32>
    %94 = math.exp %93 : vector<2x32xf32>
    %cst_40 = arith.constant 1.000000e+00 : f32
    %95 = vector.broadcast %cst_40 : f32 to vector<2x32xf32>
    %96 = arith.addf %95, %94 : vector<2x32xf32>
    %97 = arith.divf %95, %96 : vector<2x32xf32>
    %98 = vector.extract_strided_slice %85 {offsets = [0, 64], sizes = [2, 32], strides = [1, 1]} : vector<2x128xf32> to vector<2x32xf32>
    %99 = math.tanh %98 : vector<2x32xf32>
    %100 = vector.extract_strided_slice %85 {offsets = [0, 96], sizes = [2, 32], strides = [1, 1]} : vector<2x128xf32> to vector<2x32xf32>
    %101 = arith.negf %100 : vector<2x32xf32>
    %102 = math.exp %101 : vector<2x32xf32>
    %cst_41 = arith.constant 1.000000e+00 : f32
    %103 = vector.broadcast %cst_41 : f32 to vector<2x32xf32>
    %104 = arith.addf %103, %102 : vector<2x32xf32>
    %105 = arith.divf %103, %104 : vector<2x32xf32>
    %c0_42 = arith.constant 0 : index
    %c0_43 = arith.constant 0 : index
    %106 = vector.load %arg9[%c0_42, %c0_43] : memref<2x32xf32, #tpu.memory_space<vmem>>, vector<2x32xf32>
    %107 = arith.mulf %97, %106 : vector<2x32xf32>
    %108 = arith.mulf %91, %99 : vector<2x32xf32>
    %109 = arith.addf %107, %108 : vector<2x32xf32>
    %110 = math.tanh %109 : vector<2x32xf32>
    %111 = arith.mulf %105, %110 : vector<2x32xf32>
    %c0_44 = arith.constant 0 : index
    %c0_45 = arith.constant 0 : index
    %112 = vector.load %arg9[%c0_44, %c0_45] : memref<2x32xf32, #tpu.memory_space<vmem>>, vector<2x32xf32>
    tpu.vector_store %arg9[%c0_44, %c0_45], %109 {strides = array<i32>} : memref<2x32xf32, #tpu.memory_space<vmem>>, vector<2x32xf32>,
    %c0_46 = arith.constant 0 : index
    %c0_47 = arith.constant 0 : index
    %113 = vector.load %arg8[%c0_46, %c0_47] : memref<2x32xf32, #tpu.memory_space<vmem>>, vector<2x32xf32>
    tpu.vector_store %arg8[%c0_46, %c0_47], %111 {strides = array<i32>} : memref<2x32xf32, #tpu.memory_space<vmem>>, vector<2x32xf32>,
    %114 = arith.index_cast %c2_i32 : i32 to index
    %c0_48 = arith.constant 0 : index
    %c0_49 = arith.constant 0 : index
    %115 = vector.load %arg5[%114, %c0_48, %c0_49] : memref<8x2x32xf32, #tpu.memory_space<vmem>>, vector<1x2x32xf32>
    %116 = vector.shape_cast %115 : vector<1x2x32xf32> to vector<2x32xf32>
    %117 = vector.shape_cast %111 : vector<2x32xf32> to vector<1x2x32xf32>
    tpu.vector_store %arg5[%114, %c0_48, %c0_49], %117 {strides = array<i32>} : memref<8x2x32xf32, #tpu.memory_space<vmem>>, vector<1x2x32xf32>,
    %c3_i32 = arith.constant 3 : i32
    %118 = arith.index_cast %c3_i32 : i32 to index
    %c0_50 = arith.constant 0 : index
    %c0_51 = arith.constant 0 : index
    %119 = vector.load %arg1[%118, %c0_50, %c0_51] : memref<8x2x128xf32, #tpu.memory_space<vmem>>, vector<1x2x128xf32>
    %120 = vector.shape_cast %119 : vector<1x2x128xf32> to vector<2x128xf32>
    %c0_52 = arith.constant 0 : index
    %c0_53 = arith.constant 0 : index
    %121 = vector.load %arg8[%c0_52, %c0_53] : memref<2x32xf32, #tpu.memory_space<vmem>>, vector<2x32xf32>
    %cst_54 = arith.constant dense<0.000000e+00> : vector<2x128xf32>
    %122 = tpu.matmul %121, %3, %cst_54 {dimension_numbers = #tpu.dot_dimension_numbers<[1], [0], [0], [1], [0, 0, 1, 1], [], []>} : vector<2x32xf32>, vector<32x128xf32>, vector<2x128xf32> -> vector<2x128xf32>
    %123 = arith.addf %120, %122 : vector<2x128xf32>
    %124 = vector.extract_strided_slice %123 {offsets = [0, 0], sizes = [2, 32], strides = [1, 1]} : vector<2x128xf32> to vector<2x32xf32>
    %125 = arith.negf %124 : vector<2x32xf32>
    %126 = math.exp %125 : vector<2x32xf32>
    %cst_55 = arith.constant 1.000000e+00 : f32
    %127 = vector.broadcast %cst_55 : f32 to vector<2x32xf32>
    %128 = arith.addf %127, %126 : vector<2x32xf32>
    %129 = arith.divf %127, %128 : vector<2x32xf32>
    %130 = vector.extract_strided_slice %123 {offsets = [0, 32], sizes = [2, 32], strides = [1, 1]} : vector<2x128xf32> to vector<2x32xf32>
    %131 = arith.negf %130 : vector<2x32xf32>
    %132 = math.exp %131 : vector<2x32xf32>
    %cst_56 = arith.constant 1.000000e+00 : f32
    %133 = vector.broadcast %cst_56 : f32 to vector<2x32xf32>
    %134 = arith.addf %133, %132 : vector<2x32xf32>
    %135 = arith.divf %133, %134 : vector<2x32xf32>
    %136 = vector.extract_strided_slice %123 {offsets = [0, 64], sizes = [2, 32], strides = [1, 1]} : vector<2x128xf32> to vector<2x32xf32>
    %137 = math.tanh %136 : vector<2x32xf32>
    %138 = vector.extract_strided_slice %123 {offsets = [0, 96], sizes = [2, 32], strides = [1, 1]} : vector<2x128xf32> to vector<2x32xf32>
    %139 = arith.negf %138 : vector<2x32xf32>
    %140 = math.exp %139 : vector<2x32xf32>
    %cst_57 = arith.constant 1.000000e+00 : f32
    %141 = vector.broadcast %cst_57 : f32 to vector<2x32xf32>
    %142 = arith.addf %141, %140 : vector<2x32xf32>
    %143 = arith.divf %141, %142 : vector<2x32xf32>
    %c0_58 = arith.constant 0 : index
    %c0_59 = arith.constant 0 : index
    %144 = vector.load %arg9[%c0_58, %c0_59] : memref<2x32xf32, #tpu.memory_space<vmem>>, vector<2x32xf32>
    %145 = arith.mulf %135, %144 : vector<2x32xf32>
    %146 = arith.mulf %129, %137 : vector<2x32xf32>
    %147 = arith.addf %145, %146 : vector<2x32xf32>
    %148 = math.tanh %147 : vector<2x32xf32>
    %149 = arith.mulf %143, %148 : vector<2x32xf32>
    %c0_60 = arith.constant 0 : index
    %c0_61 = arith.constant 0 : index
    %150 = vector.load %arg9[%c0_60, %c0_61] : memref<2x32xf32, #tpu.memory_space<vmem>>, vector<2x32xf32>
    tpu.vector_store %arg9[%c0_60, %c0_61], %147 {strides = array<i32>} : memref<2x32xf32, #tpu.memory_space<vmem>>, vector<2x32xf32>,
    %c0_62 = arith.constant 0 : index
    %c0_63 = arith.constant 0 : index
    %151 = vector.load %arg8[%c0_62, %c0_63] : memref<2x32xf32, #tpu.memory_space<vmem>>, vector<2x32xf32>
    tpu.vector_store %arg8[%c0_62, %c0_63], %149 {strides = array<i32>} : memref<2x32xf32, #tpu.memory_space<vmem>>, vector<2x32xf32>,
    %152 = arith.index_cast %c3_i32 : i32 to index
    %c0_64 = arith.constant 0 : index
    %c0_65 = arith.constant 0 : index
    %153 = vector.load %arg5[%152, %c0_64, %c0_65] : memref<8x2x32xf32, #tpu.memory_space<vmem>>, vector<1x2x32xf32>
    %154 = vector.shape_cast %153 : vector<1x2x32xf32> to vector<2x32xf32>
    %155 = vector.shape_cast %149 : vector<2x32xf32> to vector<1x2x32xf32>
    tpu.vector_store %arg5[%152, %c0_64, %c0_65], %155 {strides = array<i32>} : memref<8x2x32xf32, #tpu.memory_space<vmem>>, vector<1x2x32xf32>,
    %c4_i32 = arith.constant 4 : i32
    %156 = arith.index_cast %c4_i32 : i32 to index
    %c0_66 = arith.constant 0 : index
    %c0_67 = arith.constant 0 : index
    %157 = vector.load %arg1[%156, %c0_66, %c0_67] : memref<8x2x128xf32, #tpu.memory_space<vmem>>, vector<1x2x128xf32>
    %158 = vector.shape_cast %157 : vector<1x2x128xf32> to vector<2x128xf32>
    %c0_68 = arith.constant 0 : index
    %c0_69 = arith.constant 0 : index
    %159 = vector.load %arg8[%c0_68, %c0_69] : memref<2x32xf32, #tpu.memory_space<vmem>>, vector<2x32xf32>
    %cst_70 = arith.constant dense<0.000000e+00> : vector<2x128xf32>
    %160 = tpu.matmul %159, %3, %cst_70 {dimension_numbers = #tpu.dot_dimension_numbers<[1], [0], [0], [1], [0, 0, 1, 1], [], []>} : vector<2x32xf32>, vector<32x128xf32>, vector<2x128xf32> -> vector<2x128xf32>
    %161 = arith.addf %158, %160 : vector<2x128xf32>
    %162 = vector.extract_strided_slice %161 {offsets = [0, 0], sizes = [2, 32], strides = [1, 1]} : vector<2x128xf32> to vector<2x32xf32>
    %163 = arith.negf %162 : vector<2x32xf32>
    %164 = math.exp %163 : vector<2x32xf32>
    %cst_71 = arith.constant 1.000000e+00 : f32
    %165 = vector.broadcast %cst_71 : f32 to vector<2x32xf32>
    %166 = arith.addf %165, %164 : vector<2x32xf32>
    %167 = arith.divf %165, %166 : vector<2x32xf32>
    %168 = vector.extract_strided_slice %161 {offsets = [0, 32], sizes = [2, 32], strides = [1, 1]} : vector<2x128xf32> to vector<2x32xf32>
    %169 = arith.negf %168 : vector<2x32xf32>
    %170 = math.exp %169 : vector<2x32xf32>
    %cst_72 = arith.constant 1.000000e+00 : f32
    %171 = vector.broadcast %cst_72 : f32 to vector<2x32xf32>
    %172 = arith.addf %171, %170 : vector<2x32xf32>
    %173 = arith.divf %171, %172 : vector<2x32xf32>
    %174 = vector.extract_strided_slice %161 {offsets = [0, 64], sizes = [2, 32], strides = [1, 1]} : vector<2x128xf32> to vector<2x32xf32>
    %175 = math.tanh %174 : vector<2x32xf32>
    %176 = vector.extract_strided_slice %161 {offsets = [0, 96], sizes = [2, 32], strides = [1, 1]} : vector<2x128xf32> to vector<2x32xf32>
    %177 = arith.negf %176 : vector<2x32xf32>
    %178 = math.exp %177 : vector<2x32xf32>
    %cst_73 = arith.constant 1.000000e+00 : f32
    %179 = vector.broadcast %cst_73 : f32 to vector<2x32xf32>
    %180 = arith.addf %179, %178 : vector<2x32xf32>
    %181 = arith.divf %179, %180 : vector<2x32xf32>
    %c0_74 = arith.constant 0 : index
    %c0_75 = arith.constant 0 : index
    %182 = vector.load %arg9[%c0_74, %c0_75] : memref<2x32xf32, #tpu.memory_space<vmem>>, vector<2x32xf32>
    %183 = arith.mulf %173, %182 : vector<2x32xf32>
    %184 = arith.mulf %167, %175 : vector<2x32xf32>
    %185 = arith.addf %183, %184 : vector<2x32xf32>
    %186 = math.tanh %185 : vector<2x32xf32>
    %187 = arith.mulf %181, %186 : vector<2x32xf32>
    %c0_76 = arith.constant 0 : index
    %c0_77 = arith.constant 0 : index
    %188 = vector.load %arg9[%c0_76, %c0_77] : memref<2x32xf32, #tpu.memory_space<vmem>>, vector<2x32xf32>
    tpu.vector_store %arg9[%c0_76, %c0_77], %185 {strides = array<i32>} : memref<2x32xf32, #tpu.memory_space<vmem>>, vector<2x32xf32>,
    %c0_78 = arith.constant 0 : index
    %c0_79 = arith.constant 0 : index
    %189 = vector.load %arg8[%c0_78, %c0_79] : memref<2x32xf32, #tpu.memory_space<vmem>>, vector<2x32xf32>
    tpu.vector_store %arg8[%c0_78, %c0_79], %187 {strides = array<i32>} : memref<2x32xf32, #tpu.memory_space<vmem>>, vector<2x32xf32>,
    %190 = arith.index_cast %c4_i32 : i32 to index
    %c0_80 = arith.constant 0 : index
    %c0_81 = arith.constant 0 : index
    %191 = vector.load %arg5[%190, %c0_80, %c0_81] : memref<8x2x32xf32, #tpu.memory_space<vmem>>, vector<1x2x32xf32>
    %192 = vector.shape_cast %191 : vector<1x2x32xf32> to vector<2x32xf32>
    %193 = vector.shape_cast %187 : vector<2x32xf32> to vector<1x2x32xf32>
    tpu.vector_store %arg5[%190, %c0_80, %c0_81], %193 {strides = array<i32>} : memref<8x2x32xf32, #tpu.memory_space<vmem>>, vector<1x2x32xf32>,
    %c5_i32 = arith.constant 5 : i32
    %194 = arith.index_cast %c5_i32 : i32 to index
    %c0_82 = arith.constant 0 : index
    %c0_83 = arith.constant 0 : index
    %195 = vector.load %arg1[%194, %c0_82, %c0_83] : memref<8x2x128xf32, #tpu.memory_space<vmem>>, vector<1x2x128xf32>
    %196 = vector.shape_cast %195 : vector<1x2x128xf32> to vector<2x128xf32>
    %c0_84 = arith.constant 0 : index
    %c0_85 = arith.constant 0 : index
    %197 = vector.load %arg8[%c0_84, %c0_85] : memref<2x32xf32, #tpu.memory_space<vmem>>, vector<2x32xf32>
    %cst_86 = arith.constant dense<0.000000e+00> : vector<2x128xf32>
    %198 = tpu.matmul %197, %3, %cst_86 {dimension_numbers = #tpu.dot_dimension_numbers<[1], [0], [0], [1], [0, 0, 1, 1], [], []>} : vector<2x32xf32>, vector<32x128xf32>, vector<2x128xf32> -> vector<2x128xf32>
    %199 = arith.addf %196, %198 : vector<2x128xf32>
    %200 = vector.extract_strided_slice %199 {offsets = [0, 0], sizes = [2, 32], strides = [1, 1]} : vector<2x128xf32> to vector<2x32xf32>
    %201 = arith.negf %200 : vector<2x32xf32>
    %202 = math.exp %201 : vector<2x32xf32>
    %cst_87 = arith.constant 1.000000e+00 : f32
    %203 = vector.broadcast %cst_87 : f32 to vector<2x32xf32>
    %204 = arith.addf %203, %202 : vector<2x32xf32>
    %205 = arith.divf %203, %204 : vector<2x32xf32>
    %206 = vector.extract_strided_slice %199 {offsets = [0, 32], sizes = [2, 32], strides = [1, 1]} : vector<2x128xf32> to vector<2x32xf32>
    %207 = arith.negf %206 : vector<2x32xf32>
    %208 = math.exp %207 : vector<2x32xf32>
    %cst_88 = arith.constant 1.000000e+00 : f32
    %209 = vector.broadcast %cst_88 : f32 to vector<2x32xf32>
    %210 = arith.addf %209, %208 : vector<2x32xf32>
    %211 = arith.divf %209, %210 : vector<2x32xf32>
    %212 = vector.extract_strided_slice %199 {offsets = [0, 64], sizes = [2, 32], strides = [1, 1]} : vector<2x128xf32> to vector<2x32xf32>
    %213 = math.tanh %212 : vector<2x32xf32>
    %214 = vector.extract_strided_slice %199 {offsets = [0, 96], sizes = [2, 32], strides = [1, 1]} : vector<2x128xf32> to vector<2x32xf32>
    %215 = arith.negf %214 : vector<2x32xf32>
    %216 = math.exp %215 : vector<2x32xf32>
    %cst_89 = arith.constant 1.000000e+00 : f32
    %217 = vector.broadcast %cst_89 : f32 to vector<2x32xf32>
    %218 = arith.addf %217, %216 : vector<2x32xf32>
    %219 = arith.divf %217, %218 : vector<2x32xf32>
    %c0_90 = arith.constant 0 : index
    %c0_91 = arith.constant 0 : index
    %220 = vector.load %arg9[%c0_90, %c0_91] : memref<2x32xf32, #tpu.memory_space<vmem>>, vector<2x32xf32>
    %221 = arith.mulf %211, %220 : vector<2x32xf32>
    %222 = arith.mulf %205, %213 : vector<2x32xf32>
    %223 = arith.addf %221, %222 : vector<2x32xf32>
    %224 = math.tanh %223 : vector<2x32xf32>
    %225 = arith.mulf %219, %224 : vector<2x32xf32>
    %c0_92 = arith.constant 0 : index
    %c0_93 = arith.constant 0 : index
    %226 = vector.load %arg9[%c0_92, %c0_93] : memref<2x32xf32, #tpu.memory_space<vmem>>, vector<2x32xf32>
    tpu.vector_store %arg9[%c0_92, %c0_93], %223 {strides = array<i32>} : memref<2x32xf32, #tpu.memory_space<vmem>>, vector<2x32xf32>,
    %c0_94 = arith.constant 0 : index
    %c0_95 = arith.constant 0 : index
    %227 = vector.load %arg8[%c0_94, %c0_95] : memref<2x32xf32, #tpu.memory_space<vmem>>, vector<2x32xf32>
    tpu.vector_store %arg8[%c0_94, %c0_95], %225 {strides = array<i32>} : memref<2x32xf32, #tpu.memory_space<vmem>>, vector<2x32xf32>,
    %228 = arith.index_cast %c5_i32 : i32 to index
    %c0_96 = arith.constant 0 : index
    %c0_97 = arith.constant 0 : index
    %229 = vector.load %arg5[%228, %c0_96, %c0_97] : memref<8x2x32xf32, #tpu.memory_space<vmem>>, vector<1x2x32xf32>
    %230 = vector.shape_cast %229 : vector<1x2x32xf32> to vector<2x32xf32>
    %231 = vector.shape_cast %225 : vector<2x32xf32> to vector<1x2x32xf32>
    tpu.vector_store %arg5[%228, %c0_96, %c0_97], %231 {strides = array<i32>} : memref<8x2x32xf32, #tpu.memory_space<vmem>>, vector<1x2x32xf32>,
    %c6_i32 = arith.constant 6 : i32
    %232 = arith.index_cast %c6_i32 : i32 to index
    %c0_98 = arith.constant 0 : index
    %c0_99 = arith.constant 0 : index
    %233 = vector.load %arg1[%232, %c0_98, %c0_99] : memref<8x2x128xf32, #tpu.memory_space<vmem>>, vector<1x2x128xf32>
    %234 = vector.shape_cast %233 : vector<1x2x128xf32> to vector<2x128xf32>
    %c0_100 = arith.constant 0 : index
    %c0_101 = arith.constant 0 : index
    %235 = vector.load %arg8[%c0_100, %c0_101] : memref<2x32xf32, #tpu.memory_space<vmem>>, vector<2x32xf32>
    %cst_102 = arith.constant dense<0.000000e+00> : vector<2x128xf32>
    %236 = tpu.matmul %235, %3, %cst_102 {dimension_numbers = #tpu.dot_dimension_numbers<[1], [0], [0], [1], [0, 0, 1, 1], [], []>} : vector<2x32xf32>, vector<32x128xf32>, vector<2x128xf32> -> vector<2x128xf32>
    %237 = arith.addf %234, %236 : vector<2x128xf32>
    %238 = vector.extract_strided_slice %237 {offsets = [0, 0], sizes = [2, 32], strides = [1, 1]} : vector<2x128xf32> to vector<2x32xf32>
    %239 = arith.negf %238 : vector<2x32xf32>
    %240 = math.exp %239 : vector<2x32xf32>
    %cst_103 = arith.constant 1.000000e+00 : f32
    %241 = vector.broadcast %cst_103 : f32 to vector<2x32xf32>
    %242 = arith.addf %241, %240 : vector<2x32xf32>
    %243 = arith.divf %241, %242 : vector<2x32xf32>
    %244 = vector.extract_strided_slice %237 {offsets = [0, 32], sizes = [2, 32], strides = [1, 1]} : vector<2x128xf32> to vector<2x32xf32>
    %245 = arith.negf %244 : vector<2x32xf32>
    %246 = math.exp %245 : vector<2x32xf32>
    %cst_104 = arith.constant 1.000000e+00 : f32
    %247 = vector.broadcast %cst_104 : f32 to vector<2x32xf32>
    %248 = arith.addf %247, %246 : vector<2x32xf32>
    %249 = arith.divf %247, %248 : vector<2x32xf32>
    %250 = vector.extract_strided_slice %237 {offsets = [0, 64], sizes = [2, 32], strides = [1, 1]} : vector<2x128xf32> to vector<2x32xf32>
    %251 = math.tanh %250 : vector<2x32xf32>
    %252 = vector.extract_strided_slice %237 {offsets = [0, 96], sizes = [2, 32], strides = [1, 1]} : vector<2x128xf32> to vector<2x32xf32>
    %253 = arith.negf %252 : vector<2x32xf32>
    %254 = math.exp %253 : vector<2x32xf32>
    %cst_105 = arith.constant 1.000000e+00 : f32
    %255 = vector.broadcast %cst_105 : f32 to vector<2x32xf32>
    %256 = arith.addf %255, %254 : vector<2x32xf32>
    %257 = arith.divf %255, %256 : vector<2x32xf32>
    %c0_106 = arith.constant 0 : index
    %c0_107 = arith.constant 0 : index
    %258 = vector.load %arg9[%c0_106, %c0_107] : memref<2x32xf32, #tpu.memory_space<vmem>>, vector<2x32xf32>
    %259 = arith.mulf %249, %258 : vector<2x32xf32>
    %260 = arith.mulf %243, %251 : vector<2x32xf32>
    %261 = arith.addf %259, %260 : vector<2x32xf32>
    %262 = math.tanh %261 : vector<2x32xf32>
    %263 = arith.mulf %257, %262 : vector<2x32xf32>
    %c0_108 = arith.constant 0 : index
    %c0_109 = arith.constant 0 : index
    %264 = vector.load %arg9[%c0_108, %c0_109] : memref<2x32xf32, #tpu.memory_space<vmem>>, vector<2x32xf32>
    tpu.vector_store %arg9[%c0_108, %c0_109], %261 {strides = array<i32>} : memref<2x32xf32, #tpu.memory_space<vmem>>, vector<2x32xf32>,
    %c0_110 = arith.constant 0 : index
    %c0_111 = arith.constant 0 : index
    %265 = vector.load %arg8[%c0_110, %c0_111] : memref<2x32xf32, #tpu.memory_space<vmem>>, vector<2x32xf32>
    tpu.vector_store %arg8[%c0_110, %c0_111], %263 {strides = array<i32>} : memref<2x32xf32, #tpu.memory_space<vmem>>, vector<2x32xf32>,
    %266 = arith.index_cast %c6_i32 : i32 to index
    %c0_112 = arith.constant 0 : index
    %c0_113 = arith.constant 0 : index
    %267 = vector.load %arg5[%266, %c0_112, %c0_113] : memref<8x2x32xf32, #tpu.memory_space<vmem>>, vector<1x2x32xf32>
    %268 = vector.shape_cast %267 : vector<1x2x32xf32> to vector<2x32xf32>
    %269 = vector.shape_cast %263 : vector<2x32xf32> to vector<1x2x32xf32>
    tpu.vector_store %arg5[%266, %c0_112, %c0_113], %269 {strides = array<i32>} : memref<8x2x32xf32, #tpu.memory_space<vmem>>, vector<1x2x32xf32>,
    %c7_i32 = arith.constant 7 : i32
    %270 = arith.index_cast %c7_i32 : i32 to index
    %c0_114 = arith.constant 0 : index
    %c0_115 = arith.constant 0 : index
    %271 = vector.load %arg1[%270, %c0_114, %c0_115] : memref<8x2x128xf32, #tpu.memory_space<vmem>>, vector<1x2x128xf32>
    %272 = vector.shape_cast %271 : vector<1x2x128xf32> to vector<2x128xf32>
    %c0_116 = arith.constant 0 : index
    %c0_117 = arith.constant 0 : index
    %273 = vector.load %arg8[%c0_116, %c0_117] : memref<2x32xf32, #tpu.memory_space<vmem>>, vector<2x32xf32>
    %cst_118 = arith.constant dense<0.000000e+00> : vector<2x128xf32>
    %274 = tpu.matmul %273, %3, %cst_118 {dimension_numbers = #tpu.dot_dimension_numbers<[1], [0], [0], [1], [0, 0, 1, 1], [], []>} : vector<2x32xf32>, vector<32x128xf32>, vector<2x128xf32> -> vector<2x128xf32>
    %275 = arith.addf %272, %274 : vector<2x128xf32>
    %276 = vector.extract_strided_slice %275 {offsets = [0, 0], sizes = [2, 32], strides = [1, 1]} : vector<2x128xf32> to vector<2x32xf32>
    %277 = arith.negf %276 : vector<2x32xf32>
    %278 = math.exp %277 : vector<2x32xf32>
    %cst_119 = arith.constant 1.000000e+00 : f32
    %279 = vector.broadcast %cst_119 : f32 to vector<2x32xf32>
    %280 = arith.addf %279, %278 : vector<2x32xf32>
    %281 = arith.divf %279, %280 : vector<2x32xf32>
    %282 = vector.extract_strided_slice %275 {offsets = [0, 32], sizes = [2, 32], strides = [1, 1]} : vector<2x128xf32> to vector<2x32xf32>
    %283 = arith.negf %282 : vector<2x32xf32>
    %284 = math.exp %283 : vector<2x32xf32>
    %cst_120 = arith.constant 1.000000e+00 : f32
    %285 = vector.broadcast %cst_120 : f32 to vector<2x32xf32>
    %286 = arith.addf %285, %284 : vector<2x32xf32>
    %287 = arith.divf %285, %286 : vector<2x32xf32>
    %288 = vector.extract_strided_slice %275 {offsets = [0, 64], sizes = [2, 32], strides = [1, 1]} : vector<2x128xf32> to vector<2x32xf32>
    %289 = math.tanh %288 : vector<2x32xf32>
    %290 = vector.extract_strided_slice %275 {offsets = [0, 96], sizes = [2, 32], strides = [1, 1]} : vector<2x128xf32> to vector<2x32xf32>
    %291 = arith.negf %290 : vector<2x32xf32>
    %292 = math.exp %291 : vector<2x32xf32>
    %cst_121 = arith.constant 1.000000e+00 : f32
    %293 = vector.broadcast %cst_121 : f32 to vector<2x32xf32>
    %294 = arith.addf %293, %292 : vector<2x32xf32>
    %295 = arith.divf %293, %294 : vector<2x32xf32>
    %c0_122 = arith.constant 0 : index
    %c0_123 = arith.constant 0 : index
    %296 = vector.load %arg9[%c0_122, %c0_123] : memref<2x32xf32, #tpu.memory_space<vmem>>, vector<2x32xf32>
    %297 = arith.mulf %287, %296 : vector<2x32xf32>
    %298 = arith.mulf %281, %289 : vector<2x32xf32>
    %299 = arith.addf %297, %298 : vector<2x32xf32>
    %300 = math.tanh %299 : vector<2x32xf32>
    %301 = arith.mulf %295, %300 : vector<2x32xf32>
    %c0_124 = arith.constant 0 : index
    %c0_125 = arith.constant 0 : index
    %302 = vector.load %arg9[%c0_124, %c0_125] : memref<2x32xf32, #tpu.memory_space<vmem>>, vector<2x32xf32>
    tpu.vector_store %arg9[%c0_124, %c0_125], %299 {strides = array<i32>} : memref<2x32xf32, #tpu.memory_space<vmem>>, vector<2x32xf32>,
    %c0_126 = arith.constant 0 : index
    %c0_127 = arith.constant 0 : index
    %303 = vector.load %arg8[%c0_126, %c0_127] : memref<2x32xf32, #tpu.memory_space<vmem>>, vector<2x32xf32>
    tpu.vector_store %arg8[%c0_126, %c0_127], %301 {strides = array<i32>} : memref<2x32xf32, #tpu.memory_space<vmem>>, vector<2x32xf32>,
    %304 = arith.index_cast %c7_i32 : i32 to index
    %c0_128 = arith.constant 0 : index
    %c0_129 = arith.constant 0 : index
    %305 = vector.load %arg5[%304, %c0_128, %c0_129] : memref<8x2x32xf32, #tpu.memory_space<vmem>>, vector<1x2x32xf32>
    %306 = vector.shape_cast %305 : vector<1x2x32xf32> to vector<2x32xf32>
    %307 = vector.shape_cast %301 : vector<2x32xf32> to vector<1x2x32xf32>
    tpu.vector_store %arg5[%304, %c0_128, %c0_129], %307 {strides = array<i32>} : memref<8x2x32xf32, #tpu.memory_space<vmem>>, vector<1x2x32xf32>,
    %c8_i32 = arith.constant 8 : i32
    %c0_i32_130 = arith.constant 0 : i32
    %308 = arith.cmpi eq, %arg0, %c0_i32_130 : i32
    %309 = arith.extui %308 : i1 to i32
    %c0_i32_131 = arith.constant 0 : i32
    %310 = arith.cmpi ne, %309, %c0_i32_131 : i32
    scf.if %310 {
      %c0_132 = arith.constant 0 : index
      %c0_133 = arith.constant 0 : index
      %311 = vector.load %arg8[%c0_132, %c0_133] : memref<2x32xf32, #tpu.memory_space<vmem>>, vector<2x32xf32>
      %c0_134 = arith.constant 0 : index
      %c0_135 = arith.constant 0 : index
      %312 = vector.load %arg6[%c0_134, %c0_135] : memref<2x32xf32, #tpu.memory_space<vmem>>, vector<2x32xf32>
      tpu.vector_store %arg6[%c0_134, %c0_135], %311 {strides = array<i32>} : memref<2x32xf32, #tpu.memory_space<vmem>>, vector<2x32xf32>,
      %c0_136 = arith.constant 0 : index
      %c0_137 = arith.constant 0 : index
      %313 = vector.load %arg9[%c0_136, %c0_137] : memref<2x32xf32, #tpu.memory_space<vmem>>, vector<2x32xf32>
      %c0_138 = arith.constant 0 : index
      %c0_139 = arith.constant 0 : index
      %314 = vector.load %arg7[%c0_138, %c0_139] : memref<2x32xf32, #tpu.memory_space<vmem>>, vector<2x32xf32>
      tpu.vector_store %arg7[%c0_138, %c0_139], %313 {strides = array<i32>} : memref<2x32xf32, #tpu.memory_space<vmem>>, vector<2x32xf32>,
    } else {
    }
    return
  }
  func.func @transform_0(%arg0: i32) -> (i32, i32, i32) {
    %c0_i32 = arith.constant 0 : i32
    %c0_i32_0 = arith.constant 0 : i32
    %c0_i32_1 = arith.constant 0 : i32
    return %arg0, %c0_i32, %c0_i32_0 : i32, i32, i32
  }
  func.func @transform_1(%arg0: i32) -> (i32, i32) {
    %c0_i32 = arith.constant 0 : i32
    %c0_i32_0 = arith.constant 0 : i32
    %c0_i32_1 = arith.constant 0 : i32
    return %c0_i32, %c0_i32_0 : i32, i32
  }
  func.func @transform_2(%arg0: i32) -> (i32, i32) {
    %c0_i32 = arith.constant 0 : i32
    %c0_i32_0 = arith.constant 0 : i32
    %c0_i32_1 = arith.constant 0 : i32
    return %c0_i32, %c0_i32_0 : i32, i32
  }
  func.func @transform_3(%arg0: i32) -> (i32, i32) {
    %c0_i32 = arith.constant 0 : i32
    %c0_i32_0 = arith.constant 0 : i32
    %c0_i32_1 = arith.constant 0 : i32
    return %c0_i32, %c0_i32_0 : i32, i32
  }
  func.func @transform_4(%arg0: i32) -> (i32, i32, i32) {
    %c0_i32 = arith.constant 0 : i32
    %c0_i32_0 = arith.constant 0 : i32
    %c0_i32_1 = arith.constant 0 : i32
    return %arg0, %c0_i32, %c0_i32_0 : i32, i32, i32
  }
  func.func @transform_5(%arg0: i32) -> (i32, i32) {
    %c0_i32 = arith.constant 0 : i32
    %c0_i32_0 = arith.constant 0 : i32
    %c0_i32_1 = arith.constant 0 : i32
    return %c0_i32, %c0_i32_0 : i32, i32
  }
  func.func @transform_6(%arg0: i32) -> (i32, i32) {
    %c0_i32 = arith.constant 0 : i32
    %c0_i32_0 = arith.constant 0 : i32
    %c0_i32_1 = arith.constant 0 : i32
    return %c0_i32, %c0_i32_0 : i32, i32
  }
}

</mosaic_0001>

<llo_original>
// kernel: tpu_custom_call.1
$region0: #{tpu_custom_call.1}
  #allocation0 [shape = 'u32[]', space=smem, size = 0x4, offset = 0x4, fixed_abs, tag = 'smem constant byte address 0x4 - core index']
  #allocation1 [shape = 'u32[144,128]{1,0:T(1,128)}', space=vmem, size = 0x12000, scoped, tag = 'internal scratch']
  #allocation2 [shape = 'f32[2,32]{1,0:T(2,128)}', space=vmem, size = 0x400, scoped, tag = 'scratch operand']
  #allocation3 [shape = 'f32[2,32]{1,0:T(2,128)}', space=vmem, size = 0x400, scoped, tag = 'scratch operand']
  %s0 = inlined_call_operand.hbm [shape: f32[8,2,128], index: 0, kind: input, shape index: {}]
  %s1 = inlined_call_operand.hbm [shape: f32[2,32], index: 1, kind: input, shape index: {}]
  %s2 = inlined_call_operand.vmem [shape: f32[2,32], index: 2, kind: input, shape index: {}]
  %s3 = inlined_call_operand.hbm [shape: f32[32,128], index: 3, kind: input, shape index: {}]
  %s4 = inlined_call_operand.hbm [shape: f32[8,2,32], index: 4, kind: output, shape index: {0}]
  %s5 = inlined_call_operand.hbm [shape: f32[2,32], index: 5, kind: output, shape index: {1}]
  %s6 = inlined_call_operand.hbm [shape: f32[2,32], index: 6, kind: output, shape index: {2}]
  %7 = xla_tuple %s4, %s5, %s6
  %s8 = sld [smem:[#allocation0]]
  $region62: #{tpu_custom_call.1} parent=0
    _
  %s10 = ssub.s32 1, %s8
  %s11 = scalar_select 0, %s10, %s8
  $region1: #{tpu_custom_call.1} parent=0
    #allocation4 [shape = 'u8[8192]{0}', space=vmem, size = 0x2000, scoped, tag = 'input window, operand 0, single buffered']
    #allocation5 [shape = 's32[1]{0}', space=sflag, size = 0x4, scoped, tag = 'scoped memory for tpu_custom_call.1']
    #allocation6 [shape = 's32[1]{0}', space=sflag, size = 0x4, scoped, tag = 'scoped memory for tpu_custom_call.1']
    #allocation7 [shape = 'u8[1024]{0}', space=vmem, size = 0x400, scoped, tag = 'input window, operand 1, single buffered']
    #allocation8 [shape = 's32[1]{0}', space=sflag, size = 0x4, scoped, tag = 'scoped memory for tpu_custom_call.1']
    #allocation9 [shape = 'u8[16384]{0}', space=vmem, size = 0x4000, scoped, tag = 'input window, operand 3, single buffered']
    #allocation10 [shape = 'u8[8192]{0}', space=vmem, size = 0x2000, scoped, tag = 'output window, operand 0, single buffered']
    #allocation11 [shape = 'u8[1024]{0}', space=vmem, size = 0x400, scoped, tag = 'output window, operand 1, single buffered']
    #allocation12 [shape = 's32[1]{0}', space=sflag, size = 0x4, scoped, tag = 'scoped memory for tpu_custom_call.1']
    #allocation13 [shape = 'u8[1024]{0}', space=vmem, size = 0x400, scoped, tag = 'output window, operand 2, single buffered']
    %12 = vsyncpa [#allocation5], 0
    %13 = vsyncpa [#allocation8], 0
    %14 = vsyncpa [#allocation6], 0
    %15 = vsyncpa [#allocation12], 0
    // Predicated region
    $region2: #{tpu_custom_call.1} parent=1 // pred_check
      _
    $region3: #{tpu_custom_call.1} parent=1 // pred_check_branch
      %17 = sbr.rel (0) target = $region5
    $region4: #{tpu_custom_call.1} parent=1 // pred_region
      %s19 = ssub.s32 256, 256
      %20 = vsyncadd [#allocation5], %s19
      %s21 = sshll.u32 [#allocation4], 4
      %s22 = int_to_ptr.vmem [resolvable:$true] %s21
      %27 = dma.hbm_to_vmem [thread:$0]  %s0, 256, %s22, [#allocation5], 32, 32, 2
    $region5: #{tpu_custom_call.1} parent=1 // pred_fallthru
      _
    // Predicated region
    $region6: #{tpu_custom_call.1} parent=1 // pred_check
      _
    $region7: #{tpu_custom_call.1} parent=1 // pred_check_branch
      %29 = sbr.rel (0) target = $region9
    $region8: #{tpu_custom_call.1} parent=1 // pred_region
      %s31 = ssub.s32 32, 32
      %32 = vsyncadd [#allocation8], %s31
      %s34 = sshll.u32 [#allocation7], 4
      %s35 = int_to_ptr.vmem [resolvable:$true] %s34
      %37 = dma.hbm_to_vmem [thread:$0]  %s1, 32, %s35, [#allocation8]
    $region9: #{tpu_custom_call.1} parent=1 // pred_fallthru
      _
    // Predicated region
    $region10: #{tpu_custom_call.1} parent=1 // pred_check
      _
    $region11: #{tpu_custom_call.1} parent=1 // pred_check_branch
      %39 = sbr.rel (0) target = $region13
    $region12: #{tpu_custom_call.1} parent=1 // pred_region
      _
    $region13: #{tpu_custom_call.1} parent=1 // pred_fallthru
      _
    // Predicated region
    $region14: #{tpu_custom_call.1} parent=1 // pred_check
      _
    $region15: #{tpu_custom_call.1} parent=1 // pred_check_branch
      %41 = sbr.rel (0) target = $region17
    $region16: #{tpu_custom_call.1} parent=1 // pred_region
      %s43 = ssub.s32 512, 512
      %44 = vsyncadd [#allocation8], %s43
      %s45 = sshll.u32 [#allocation9], 4
      %s46 = int_to_ptr.vmem [resolvable:$true] %s45
      %51 = dma.hbm_to_vmem [thread:$0]  %s3, 512, %s46, [#allocation8], 128, 128, 8
    $region17: #{tpu_custom_call.1} parent=1 // pred_fallthru
      _
    // Predicated region
    $region18: #{tpu_custom_call.1} parent=1 // pred_check
      _
    $region19: #{tpu_custom_call.1} parent=1 // pred_check_branch
      %53 = sbr.rel (0) target = $region21
    $region20: #{tpu_custom_call.1} parent=1 // pred_region
      %54 = dma.done [#allocation5], 256
    $region21: #{tpu_custom_call.1} parent=1 // pred_fallthru
      _
    // Predicated region
    $region22: #{tpu_custom_call.1} parent=1 // pred_check
      _
    $region23: #{tpu_custom_call.1} parent=1 // pred_check_branch
      %56 = sbr.rel (0) target = $region25
    $region24: #{tpu_custom_call.1} parent=1 // pred_region
      %57 = dma.done [#allocation8], 32
    $region25: #{tpu_custom_call.1} parent=1 // pred_fallthru
      _
    // Predicated region
    $region26: #{tpu_custom_call.1} parent=1 // pred_check
      _
    $region27: #{tpu_custom_call.1} parent=1 // pred_check_branch
      %59 = sbr.rel (0) target = $region29
    $region28: #{tpu_custom_call.1} parent=1 // pred_region
      %60 = dma.done [#allocation8], 512
    $region29: #{tpu_custom_call.1} parent=1 // pred_fallthru
      _
    %p61 = scmp.eq.s32.totalorder 0, 0
    // Predicated region
    $region30: #{tpu_custom_call.1} parent=1 // pred_check
      %p62 = pneg %p61
    $region31: #{tpu_custom_call.1} parent=1 // pred_check_branch
      %64 = sbr.rel (%p62) target = $region33
    $region32: #{tpu_custom_call.1} parent=1 // pred_region
      %v65 = vld [vmem:[#allocation7] sm:$0x3]
      %vm66 = vcmask 254976
      %67 = vst.msk [vmem:[#allocation2] sm:$0x3] %vm66, %v65
      %v68 = vld [vmem:[%s2] sm:$0x3]
      %69 = vst.msk [vmem:[#allocation3] sm:$0x3] %vm66, %v68
    $region33: #{tpu_custom_call.1} parent=1 // pred_fallthru
      _
    %v70 = vld [vmem:[#allocation9] sm:$0xff]
    %v71 = vld [vmem:[#allocation9 + $0x8] sm:$0xff]
    %v72 = vld [vmem:[#allocation9 + $0x10] sm:$0xff]
    %v73 = vld [vmem:[#allocation9 + $0x18] sm:$0xff]
    %v74 = vld [vmem:[#allocation4] sm:$0x3]
    %v75 = vld [vmem:[#allocation2] sm:$0x3]
    %vm76 = vcmask 261120
    %v78 = vsel %vm76, %v75, 0
    %80 = vmatprep.subr.mxu0 0.0
    %81 = vmatpush1.msra.mxu0 0.0
    %82 = vmatprep.subr.mxu0 0.0
    %83 = vmatpush1.msra.mxu0 0.0
    %84 = vmatprep.subr.mxu0 0.0
    %85 = vmatpush1.msra.mxu0 0.0
    %86 = vmatprep.subr.mxu0 0.0
    %87 = vmatpush1.msra.mxu0 0.0
    %88 = vmatprep.subr.mxu0 0.0
    %89 = vmatpush1.msra.mxu0 0.0
    %90 = vmatprep.subr.mxu0 0.0
    %91 = vmatpush1.msra.mxu0 0.0
    %92 = vmatprep.subr.mxu0 0.0
    %93 = vmatpush1.msra.mxu0 0.0
    %94 = vmatprep.subr.mxu0 0.0
    %95 = vmatpush1.msra.mxu0 0.0
    %96 = vmatprep.subr.mxu0 0.0
    %97 = vmatpush1.msra.mxu0 0.0
    %98 = vmatprep.subr.mxu0 0.0
    %99 = vmatpush1.msra.mxu0 0.0
    %100 = vmatprep.subr.mxu0 0.0
    %101 = vmatpush1.msra.mxu0 0.0
    %102 = vmatprep.subr.mxu0 0.0
    %103 = vmatpush1.msra.mxu0 0.0
    %104 = vmatprep.subr.mxu0 0.0
    %105 = vmatpush1.msra.mxu0 %v73
    %106 = vmatprep.subr.mxu0 0.0
    %107 = vmatpush1.msra.mxu0 %v72
    %108 = vmatprep.subr.mxu0 0.0
    %109 = vmatpush1.msra.mxu0 %v71
    %110 = vmatprep.subr.mxu0 0.0
    %111 = vmatpush1.msra.mxu0 %v70
    %112 = vmatprep.subr.mxu0 0.0
    %113 = vmatpush2.msra.mxu0 0.0
    %114 = vmatprep.subr.mxu0 0.0
    %115 = vmatpush2.msra.mxu0 0.0
    %116 = vmatprep.subr.mxu0 0.0
    %117 = vmatpush2.msra.mxu0 0.0
    %118 = vmatprep.subr.mxu0 0.0
    %119 = vmatpush2.msra.mxu0 0.0
    %120 = vmatprep.subr.mxu0 0.0
    %121 = vmatpush2.msra.mxu0 0.0
    %122 = vmatprep.subr.mxu0 0.0
    %123 = vmatpush2.msra.mxu0 0.0
    %124 = vmatprep.subr.mxu0 0.0
    %125 = vmatpush2.msra.mxu0 0.0
    %126 = vmatprep.subr.mxu0 0.0
    %127 = vmatpush2.msra.mxu0 0.0
    %128 = vmatprep.subr.mxu0 0.0
    %129 = vmatpush2.msra.mxu0 0.0
    %130 = vmatprep.subr.mxu0 0.0
    %131 = vmatpush2.msra.mxu0 0.0
    %132 = vmatprep.subr.mxu0 0.0
    %133 = vmatpush2.msra.mxu0 0.0
    %134 = vmatprep.subr.mxu0 0.0
    %135 = vmatpush2.msra.mxu0 0.0
    %136 = vmatprep.subr.mxu0 0.0
    %137 = vmatpush2.msra.mxu0 0.0
    %138 = vmatprep.subr.mxu0 0.0
    %139 = vmatpush2.msra.mxu0 0.0
    %140 = vmatprep.subr.mxu0 0.0
    %141 = vmatpush2.msra.mxu0 0.0
    %142 = vmatprep.subr.mxu0 0.0
    %143 = vmatpush2.msra.mxu0 0.0
    %144 = vmatprep.mubr.f32.mxu0 0.0
    %145 = vmatmul.mubr.f32.gmra.mxu0 %v78
    %v146 = vpop.f32.mrf.mxu0
    %v147 = vadd.f32 0.0, %v146
    %v148 = vpop.f32.mrf.mxu0
    %149 = vdwg.mxu0
    %v150 = vadd.f32 %v74, %v147
    %v151 = vxor.u32 %v150, 2147483648
    %v152 = vmul.f32 %v151, 1.442695
    %v153 = vpow.pop %v152
    %v154 = vadd.f32 %v153, 1.0
    %v155 = vrcp.pop %v154
    %v156 = vmul.f32 1.0, %v155
    %v157 = vtanh.pop %v150
    %v158 = vld [vmem:[#allocation3] sm:$0x3]
    %160 = vrot.lane.b32.xlu0 %v158, 32
    %v161 = vpop.permute.xlu0 %160
    %v163 = vmul.f32 %v156, %v161
    %165 = vrot.lane.b32.xlu0 %v157, 64
    %v166 = vpop.permute.xlu0 %165
    %v168 = vmul.f32 %v156, %v166
    %170 = vrot.lane.b32.xlu0 %v168, 32
    %v171 = vpop.permute.xlu0 %170
    %v173 = vadd.f32 %v163, %v171
    %v174 = vtanh.pop %v173
    %176 = vrot.lane.b32.xlu0 %v174, 64
    %v177 = vpop.permute.xlu0 %176
    %v179 = vmul.f32 %v156, %v177
    %181 = vrot.lane.b32.xlu0 %v173, 96
    %v182 = vpop.permute.xlu0 %181
    %vm184 = vcmask 254976
    %185 = vst.msk [vmem:[#allocation3] sm:$0x3] %vm184, %v182
    %187 = vrot.lane.b32.xlu0 %v179, 32
    %v188 = vpop.permute.xlu0 %187
    %190 = vst.msk [vmem:[#allocation2] sm:$0x3] %vm184, %v188
    %191 = vst.msk [vmem:[#allocation10] sm:$0x3] %vm184, %v188
    %s192 = scalar_lea.vmem [#allocation4], 2
    %v193 = vld [vmem:[%s192] sm:$0x3]
    %v194 = vld [vmem:[#allocation2] sm:$0x3]
    %v196 = vsel %vm76, %v194, 0
    %198 = vmatprep.subr.mxu0 0.0
    %199 = vmatpush1.msra.mxu0 0.0
    %200 = vmatprep.subr.mxu0 0.0
    %201 = vmatpush1.msra.mxu0 0.0
    %202 = vmatprep.subr.mxu0 0.0
    %203 = vmatpush1.msra.mxu0 0.0
    %204 = vmatprep.subr.mxu0 0.0
    %205 = vmatpush1.msra.mxu0 0.0
    %206 = vmatprep.subr.mxu0 0.0
    %207 = vmatpush1.msra.mxu0 0.0
    %208 = vmatprep.subr.mxu0 0.0
    %209 = vmatpush1.msra.mxu0 0.0
    %210 = vmatprep.subr.mxu0 0.0
    %211 = vmatpush1.msra.mxu0 0.0
    %212 = vmatprep.subr.mxu0 0.0
    %213 = vmatpush1.msra.mxu0 0.0
    %214 = vmatprep.subr.mxu0 0.0
    %215 = vmatpush1.msra.mxu0 0.0
    %216 = vmatprep.subr.mxu0 0.0
    %217 = vmatpush1.msra.mxu0 0.0
    %218 = vmatprep.subr.mxu0 0.0
    %219 = vmatpush1.msra.mxu0 0.0
    %220 = vmatprep.subr.mxu0 0.0
    %221 = vmatpush1.msra.mxu0 0.0
    %222 = vmatprep.subr.mxu0 0.0
    %223 = vmatpush1.msra.mxu0 %v73
    %224 = vmatprep.subr.mxu0 0.0
    %225 = vmatpush1.msra.mxu0 %v72
    %226 = vmatprep.subr.mxu0 0.0
    %227 = vmatpush1.msra.mxu0 %v71
    %228 = vmatprep.subr.mxu0 0.0
    %229 = vmatpush1.msra.mxu0 %v70
    %230 = vmatprep.subr.mxu0 0.0
    %231 = vmatpush2.msra.mxu0 0.0
    %232 = vmatprep.subr.mxu0 0.0
    %233 = vmatpush2.msra.mxu0 0.0
    %234 = vmatprep.subr.mxu0 0.0
    %235 = vmatpush2.msra.mxu0 0.0
    %236 = vmatprep.subr.mxu0 0.0
    %237 = vmatpush2.msra.mxu0 0.0
    %238 = vmatprep.subr.mxu0 0.0
    %239 = vmatpush2.msra.mxu0 0.0
    %240 = vmatprep.subr.mxu0 0.0
    %241 = vmatpush2.msra.mxu0 0.0
    %242 = vmatprep.subr.mxu0 0.0
    %243 = vmatpush2.msra.mxu0 0.0
    %244 = vmatprep.subr.mxu0 0.0
    %245 = vmatpush2.msra.mxu0 0.0
    %246 = vmatprep.subr.mxu0 0.0
    %247 = vmatpush2.msra.mxu0 0.0
    %248 = vmatprep.subr.mxu0 0.0
    %249 = vmatpush2.msra.mxu0 0.0
    %250 = vmatprep.subr.mxu0 0.0
    %251 = vmatpush2.msra.mxu0 0.0
    %252 = vmatprep.subr.mxu0 0.0
    %253 = vmatpush2.msra.mxu0 0.0
    %254 = vmatprep.subr.mxu0 0.0
    %255 = vmatpush2.msra.mxu0 0.0
    %256 = vmatprep.subr.mxu0 0.0
    %257 = vmatpush2.msra.mxu0 0.0
    %258 = vmatprep.subr.mxu0 0.0
    %259 = vmatpush2.msra.mxu0 0.0
    %260 = vmatprep.subr.mxu0 0.0
    %261 = vmatpush2.msra.mxu0 0.0
    %262 = vmatprep.mubr.f32.mxu0 0.0
    %263 = vmatmul.mubr.f32.gmra.mxu0 %v196
    %v264 = vpop.f32.mrf.mxu0
    %v265 = vadd.f32 0.0, %v264
    %v266 = vpop.f32.mrf.mxu0
    %267 = vdwg.mxu0
    %v268 = vadd.f32 %v193, %v265
    %v269 = vxor.u32 %v268, 2147483648
    %v270 = vmul.f32 %v269, 1.442695
    %v271 = vpow.pop %v270
    %v272 = vadd.f32 %v271, 1.0
    %v273 = vrcp.pop %v272
    %v274 = vmul.f32 1.0, %v273
    %v275 = vtanh.pop %v268
    %v276 = vld [vmem:[#allocation3] sm:$0x3]
    %278 = vrot.lane.b32.xlu0 %v276, 32
    %v279 = vpop.permute.xlu0 %278
    %v281 = vmul.f32 %v274, %v279
    %283 = vrot.lane.b32.xlu0 %v275, 64
    %v284 = vpop.permute.xlu0 %283
    %v286 = vmul.f32 %v274, %v284
    %288 = vrot.lane.b32.xlu0 %v286, 32
    %v289 = vpop.permute.xlu0 %288
    %v291 = vadd.f32 %v281, %v289
    %v292 = vtanh.pop %v291
    %294 = vrot.lane.b32.xlu0 %v292, 64
    %v295 = vpop.permute.xlu0 %294
    %v297 = vmul.f32 %v274, %v295
    %299 = vrot.lane.b32.xlu0 %v291, 96
    %v300 = vpop.permute.xlu0 %299
    %302 = vst.msk [vmem:[#allocation3] sm:$0x3] %vm184, %v300
    %304 = vrot.lane.b32.xlu0 %v297, 32
    %v305 = vpop.permute.xlu0 %304
    %307 = vst.msk [vmem:[#allocation2] sm:$0x3] %vm184, %v305
    %s308 = scalar_lea.vmem [#allocation10], 2
    %309 = vst.msk [vmem:[%s308] sm:$0x3] %vm184, %v305
    %s310 = scalar_lea.vmem [#allocation4], 4
    %v311 = vld [vmem:[%s310] sm:$0x3]
    %v312 = vld [vmem:[#allocation2] sm:$0x3]
    %v314 = vsel %vm76, %v312, 0
    %316 = vmatprep.subr.mxu0 0.0
    %317 = vmatpush1.msra.mxu0 0.0
    %318 = vmatprep.subr.mxu0 0.0
    %319 = vmatpush1.msra.mxu0 0.0
    %320 = vmatprep.subr.mxu0 0.0
    %321 = vmatpush1.msra.mxu0 0.0
    %322 = vmatprep.subr.mxu0 0.0
    %323 = vmatpush1.msra.mxu0 0.0
    %324 = vmatprep.subr.mxu0 0.0
    %325 = vmatpush1.msra.mxu0 0.0
    %326 = vmatprep.subr.mxu0 0.0
    %327 = vmatpush1.msra.mxu0 0.0
    %328 = vmatprep.subr.mxu0 0.0
    %329 = vmatpush1.msra.mxu0 0.0
    %330 = vmatprep.subr.mxu0 0.0
    %331 = vmatpush1.msra.mxu0 0.0
    %332 = vmatprep.subr.mxu0 0.0
    %333 = vmatpush1.msra.mxu0 0.0
    %334 = vmatprep.subr.mxu0 0.0
    %335 = vmatpush1.msra.mxu0 0.0
    %336 = vmatprep.subr.mxu0 0.0
    %337 = vmatpush1.msra.mxu0 0.0
    %338 = vmatprep.subr.mxu0 0.0
    %339 = vmatpush1.msra.mxu0 0.0
    %340 = vmatprep.subr.mxu0 0.0
    %341 = vmatpush1.msra.mxu0 %v73
    %342 = vmatprep.subr.mxu0 0.0
    %343 = vmatpush1.msra.mxu0 %v72
    %344 = vmatprep.subr.mxu0 0.0
    %345 = vmatpush1.msra.mxu0 %v71
    %346 = vmatprep.subr.mxu0 0.0
    %347 = vmatpush1.msra.mxu0 %v70
    %348 = vmatprep.subr.mxu0 0.0
    %349 = vmatpush2.msra.mxu0 0.0
    %350 = vmatprep.subr.mxu0 0.0
    %351 = vmatpush2.msra.mxu0 0.0
    %352 = vmatprep.subr.mxu0 0.0
    %353 = vmatpush2.msra.mxu0 0.0
    %354 = vmatprep.subr.mxu0 0.0
    %355 = vmatpush2.msra.mxu0 0.0
    %356 = vmatprep.subr.mxu0 0.0
    %357 = vmatpush2.msra.mxu0 0.0
    %358 = vmatprep.subr.mxu0 0.0
    %359 = vmatpush2.msra.mxu0 0.0
    %360 = vmatprep.subr.mxu0 0.0
    %361 = vmatpush2.msra.mxu0 0.0
    %362 = vmatprep.subr.mxu0 0.0
    %363 = vmatpush2.msra.mxu0 0.0
    %364 = vmatprep.subr.mxu0 0.0
    %365 = vmatpush2.msra.mxu0 0.0
    %366 = vmatprep.subr.mxu0 0.0
    %367 = vmatpush2.msra.mxu0 0.0
    %368 = vmatprep.subr.mxu0 0.0
    %369 = vmatpush2.msra.mxu0 0.0
    %370 = vmatprep.subr.mxu0 0.0
    %371 = vmatpush2.msra.mxu0 0.0
    %372 = vmatprep.subr.mxu0 0.0
    %373 = vmatpush2.msra.mxu0 0.0
    %374 = vmatprep.subr.mxu0 0.0
    %375 = vmatpush2.msra.mxu0 0.0
    %376 = vmatprep.subr.mxu0 0.0
    %377 = vmatpush2.msra.mxu0 0.0
    %378 = vmatprep.subr.mxu0 0.0
    %379 = vmatpush2.msra.mxu0 0.0
    %380 = vmatprep.mubr.f32.mxu0 0.0
    %381 = vmatmul.mubr.f32.gmra.mxu0 %v314
    %v382 = vpop.f32.mrf.mxu0
    %v383 = vadd.f32 0.0, %v382
    %v384 = vpop.f32.mrf.mxu0
    %385 = vdwg.mxu0
    %v386 = vadd.f32 %v311, %v383
    %v387 = vxor.u32 %v386, 2147483648
    %v388 = vmul.f32 %v387, 1.442695
    %v389 = vpow.pop %v388
    %v390 = vadd.f32 %v389, 1.0
    %v391 = vrcp.pop %v390
    %v392 = vmul.f32 1.0, %v391
    %v393 = vtanh.pop %v386
    %v394 = vld [vmem:[#allocation3] sm:$0x3]
    %396 = vrot.lane.b32.xlu0 %v394, 32
    %v397 = vpop.permute.xlu0 %396
    %v399 = vmul.f32 %v392, %v397
    %401 = vrot.lane.b32.xlu0 %v393, 64
    %v402 = vpop.permute.xlu0 %401
    %v404 = vmul.f32 %v392, %v402
    %406 = vrot.lane.b32.xlu0 %v404, 32
    %v407 = vpop.permute.xlu0 %406
    %v409 = vadd.f32 %v399, %v407
    %v410 = vtanh.pop %v409
    %412 = vrot.lane.b32.xlu0 %v410, 64
    %v413 = vpop.permute.xlu0 %412
    %v415 = vmul.f32 %v392, %v413
    %417 = vrot.lane.b32.xlu0 %v409, 96
    %v418 = vpop.permute.xlu0 %417
    %420 = vst.msk [vmem:[#allocation3] sm:$0x3] %vm184, %v418
    %422 = vrot.lane.b32.xlu0 %v415, 32
    %v423 = vpop.permute.xlu0 %422
    %425 = vst.msk [vmem:[#allocation2] sm:$0x3] %vm184, %v423
    %s426 = scalar_lea.vmem [#allocation10], 4
    %427 = vst.msk [vmem:[%s426] sm:$0x3] %vm184, %v423
    %s428 = scalar_lea.vmem [#allocation4], 6
    %v429 = vld [vmem:[%s428] sm:$0x3]
    %v430 = vld [vmem:[#allocation2] sm:$0x3]
    %v432 = vsel %vm76, %v430, 0
    %434 = vmatprep.subr.mxu0 0.0
    %435 = vmatpush1.msra.mxu0 0.0
    %436 = vmatprep.subr.mxu0 0.0
    %437 = vmatpush1.msra.mxu0 0.0
    %438 = vmatprep.subr.mxu0 0.0
    %439 = vmatpush1.msra.mxu0 0.0
    %440 = vmatprep.subr.mxu0 0.0
    %441 = vmatpush1.msra.mxu0 0.0
    %442 = vmatprep.subr.mxu0 0.0
    %443 = vmatpush1.msra.mxu0 0.0
    %444 = vmatprep.subr.mxu0 0.0
    %445 = vmatpush1.msra.mxu0 0.0
    %446 = vmatprep.subr.mxu0 0.0
    %447 = vmatpush1.msra.mxu0 0.0
    %448 = vmatprep.subr.mxu0 0.0
    %449 = vmatpush1.msra.mxu0 0.0
    %450 = vmatprep.subr.mxu0 0.0
    %451 = vmatpush1.msra.mxu0 0.0
    %452 = vmatprep.subr.mxu0 0.0
    %453 = vmatpush1.msra.mxu0 0.0
    %454 = vmatprep.subr.mxu0 0.0
    %455 = vmatpush1.msra.mxu0 0.0
    %456 = vmatprep.subr.mxu0 0.0
    %457 = vmatpush1.msra.mxu0 0.0
    %458 = vmatprep.subr.mxu0 0.0
    %459 = vmatpush1.msra.mxu0 %v73
    %460 = vmatprep.subr.mxu0 0.0
    %461 = vmatpush1.msra.mxu0 %v72
    %462 = vmatprep.subr.mxu0 0.0
    %463 = vmatpush1.msra.mxu0 %v71
    %464 = vmatprep.subr.mxu0 0.0
    %465 = vmatpush1.msra.mxu0 %v70
    %466 = vmatprep.subr.mxu0 0.0
    %467 = vmatpush2.msra.mxu0 0.0
    %468 = vmatprep.subr.mxu0 0.0
    %469 = vmatpush2.msra.mxu0 0.0
    %470 = vmatprep.subr.mxu0 0.0
    %471 = vmatpush2.msra.mxu0 0.0
    %472 = vmatprep.subr.mxu0 0.0
    %473 = vmatpush2.msra.mxu0 0.0
    %474 = vmatprep.subr.mxu0 0.0
    %475 = vmatpush2.msra.mxu0 0.0
    %476 = vmatprep.subr.mxu0 0.0
    %477 = vmatpush2.msra.mxu0 0.0
    %478 = vmatprep.subr.mxu0 0.0
    %479 = vmatpush2.msra.mxu0 0.0
    %480 = vmatprep.subr.mxu0 0.0
    %481 = vmatpush2.msra.mxu0 0.0
    %482 = vmatprep.subr.mxu0 0.0
    %483 = vmatpush2.msra.mxu0 0.0
    %484 = vmatprep.subr.mxu0 0.0
    %485 = vmatpush2.msra.mxu0 0.0
    %486 = vmatprep.subr.mxu0 0.0
    %487 = vmatpush2.msra.mxu0 0.0
    %488 = vmatprep.subr.mxu0 0.0
    %489 = vmatpush2.msra.mxu0 0.0
    %490 = vmatprep.subr.mxu0 0.0
    %491 = vmatpush2.msra.mxu0 0.0
    %492 = vmatprep.subr.mxu0 0.0
    %493 = vmatpush2.msra.mxu0 0.0
    %494 = vmatprep.subr.mxu0 0.0
    %495 = vmatpush2.msra.mxu0 0.0
    %496 = vmatprep.subr.mxu0 0.0
    %497 = vmatpush2.msra.mxu0 0.0
    %498 = vmatprep.mubr.f32.mxu0 0.0
    %499 = vmatmul.mubr.f32.gmra.mxu0 %v432
    %v500 = vpop.f32.mrf.mxu0
    %v501 = vadd.f32 0.0, %v500
    %v502 = vpop.f32.mrf.mxu0
    %503 = vdwg.mxu0
    %v504 = vadd.f32 %v429, %v501
    %v505 = vxor.u32 %v504, 2147483648
    %v506 = vmul.f32 %v505, 1.442695
    %v507 = vpow.pop %v506
    %v508 = vadd.f32 %v507, 1.0
    %v509 = vrcp.pop %v508
    %v510 = vmul.f32 1.0, %v509
    %v511 = vtanh.pop %v504
    %v512 = vld [vmem:[#allocation3] sm:$0x3]
    %514 = vrot.lane.b32.xlu0 %v512, 32
    %v515 = vpop.permute.xlu0 %514
    %v517 = vmul.f32 %v510, %v515
    %519 = vrot.lane.b32.xlu0 %v511, 64
    %v520 = vpop.permute.xlu0 %519
    %v522 = vmul.f32 %v510, %v520
    %524 = vrot.lane.b32.xlu0 %v522, 32
    %v525 = vpop.permute.xlu0 %524
    %v527 = vadd.f32 %v517, %v525
    %v528 = vtanh.pop %v527
    %530 = vrot.lane.b32.xlu0 %v528, 64
    %v531 = vpop.permute.xlu0 %530
    %v533 = vmul.f32 %v510, %v531
    %535 = vrot.lane.b32.xlu0 %v527, 96
    %v536 = vpop.permute.xlu0 %535
    %538 = vst.msk [vmem:[#allocation3] sm:$0x3] %vm184, %v536
    %540 = vrot.lane.b32.xlu0 %v533, 32
    %v541 = vpop.permute.xlu0 %540
    %543 = vst.msk [vmem:[#allocation2] sm:$0x3] %vm184, %v541
    %s544 = scalar_lea.vmem [#allocation10], 6
    %545 = vst.msk [vmem:[%s544] sm:$0x3] %vm184, %v541
    %s546 = scalar_lea.vmem [#allocation4], 8
    %v547 = vld [vmem:[%s546] sm:$0x3]
    %v548 = vld [vmem:[#allocation2] sm:$0x3]
    %v550 = vsel %vm76, %v548, 0
    %552 = vmatprep.subr.mxu0 0.0
    %553 = vmatpush1.msra.mxu0 0.0
    %554 = vmatprep.subr.mxu0 0.0
    %555 = vmatpush1.msra.mxu0 0.0
    %556 = vmatprep.subr.mxu0 0.0
    %557 = vmatpush1.msra.mxu0 0.0
    %558 = vmatprep.subr.mxu0 0.0
    %559 = vmatpush1.msra.mxu0 0.0
    %560 = vmatprep.subr.mxu0 0.0
    %561 = vmatpush1.msra.mxu0 0.0
    %562 = vmatprep.subr.mxu0 0.0
    %563 = vmatpush1.msra.mxu0 0.0
    %564 = vmatprep.subr.mxu0 0.0
    %565 = vmatpush1.msra.mxu0 0.0
    %566 = vmatprep.subr.mxu0 0.0
    %567 = vmatpush1.msra.mxu0 0.0
    %568 = vmatprep.subr.mxu0 0.0
    %569 = vmatpush1.msra.mxu0 0.0
    %570 = vmatprep.subr.mxu0 0.0
    %571 = vmatpush1.msra.mxu0 0.0
    %572 = vmatprep.subr.mxu0 0.0
    %573 = vmatpush1.msra.mxu0 0.0
    %574 = vmatprep.subr.mxu0 0.0
    %575 = vmatpush1.msra.mxu0 0.0
    %576 = vmatprep.subr.mxu0 0.0
    %577 = vmatpush1.msra.mxu0 %v73
    %578 = vmatprep.subr.mxu0 0.0
    %579 = vmatpush1.msra.mxu0 %v72
    %580 = vmatprep.subr.mxu0 0.0
    %581 = vmatpush1.msra.mxu0 %v71
    %582 = vmatprep.subr.mxu0 0.0
    %583 = vmatpush1.msra.mxu0 %v70
    %584 = vmatprep.subr.mxu0 0.0
    %585 = vmatpush2.msra.mxu0 0.0
    %586 = vmatprep.subr.mxu0 0.0
    %587 = vmatpush2.msra.mxu0 0.0
    %588 = vmatprep.subr.mxu0 0.0
    %589 = vmatpush2.msra.mxu0 0.0
    %590 = vmatprep.subr.mxu0 0.0
    %591 = vmatpush2.msra.mxu0 0.0
    %592 = vmatprep.subr.mxu0 0.0
    %593 = vmatpush2.msra.mxu0 0.0
    %594 = vmatprep.subr.mxu0 0.0
    %595 = vmatpush2.msra.mxu0 0.0
    %596 = vmatprep.subr.mxu0 0.0
    %597 = vmatpush2.msra.mxu0 0.0
    %598 = vmatprep.subr.mxu0 0.0
    %599 = vmatpush2.msra.mxu0 0.0
    %600 = vmatprep.subr.mxu0 0.0
    %601 = vmatpush2.msra.mxu0 0.0
    %602 = vmatprep.subr.mxu0 0.0
    %603 = vmatpush2.msra.mxu0 0.0
    %604 = vmatprep.subr.mxu0 0.0
    %605 = vmatpush2.msra.mxu0 0.0
    %606 = vmatprep.subr.mxu0 0.0
    %607 = vmatpush2.msra.mxu0 0.0
    %608 = vmatprep.subr.mxu0 0.0
    %609 = vmatpush2.msra.mxu0 0.0
    %610 = vmatprep.subr.mxu0 0.0
    %611 = vmatpush2.msra.mxu0 0.0
    %612 = vmatprep.subr.mxu0 0.0
    %613 = vmatpush2.msra.mxu0 0.0
    %614 = vmatprep.subr.mxu0 0.0
    %615 = vmatpush2.msra.mxu0 0.0
    %616 = vmatprep.mubr.f32.mxu0 0.0
    %617 = vmatmul.mubr.f32.gmra.mxu0 %v550
    %v618 = vpop.f32.mrf.mxu0
    %v619 = vadd.f32 0.0, %v618
    %v620 = vpop.f32.mrf.mxu0
    %621 = vdwg.mxu0
    %v622 = vadd.f32 %v547, %v619
    %v623 = vxor.u32 %v622, 2147483648
    %v624 = vmul.f32 %v623, 1.442695
    %v625 = vpow.pop %v624
    %v626 = vadd.f32 %v625, 1.0
    %v627 = vrcp.pop %v626
    %v628 = vmul.f32 1.0, %v627
    %v629 = vtanh.pop %v622
    %v630 = vld [vmem:[#allocation3] sm:$0x3]
    %632 = vrot.lane.b32.xlu0 %v630, 32
    %v633 = vpop.permute.xlu0 %632
    %v635 = vmul.f32 %v628, %v633
    %637 = vrot.lane.b32.xlu0 %v629, 64
    %v638 = vpop.permute.xlu0 %637
    %v640 = vmul.f32 %v628, %v638
    %642 = vrot.lane.b32.xlu0 %v640, 32
    %v643 = vpop.permute.xlu0 %642
    %v645 = vadd.f32 %v635, %v643
    %v646 = vtanh.pop %v645
    %648 = vrot.lane.b32.xlu0 %v646, 64
    %v649 = vpop.permute.xlu0 %648
    %v651 = vmul.f32 %v628, %v649
    %653 = vrot.lane.b32.xlu0 %v645, 96
    %v654 = vpop.permute.xlu0 %653
    %656 = vst.msk [vmem:[#allocation3] sm:$0x3] %vm184, %v654
    %658 = vrot.lane.b32.xlu0 %v651, 32
    %v659 = vpop.permute.xlu0 %658
    %661 = vst.msk [vmem:[#allocation2] sm:$0x3] %vm184, %v659
    %s662 = scalar_lea.vmem [#allocation10], 8
    %663 = vst.msk [vmem:[%s662] sm:$0x3] %vm184, %v659
    %s664 = scalar_lea.vmem [#allocation4], 10
    %v665 = vld [vmem:[%s664] sm:$0x3]
    %v666 = vld [vmem:[#allocation2] sm:$0x3]
    %v668 = vsel %vm76, %v666, 0
    %670 = vmatprep.subr.mxu0 0.0
    %671 = vmatpush1.msra.mxu0 0.0
    %672 = vmatprep.subr.mxu0 0.0
    %673 = vmatpush1.msra.mxu0 0.0
    %674 = vmatprep.subr.mxu0 0.0
    %675 = vmatpush1.msra.mxu0 0.0
    %676 = vmatprep.subr.mxu0 0.0
    %677 = vmatpush1.msra.mxu0 0.0
    %678 = vmatprep.subr.mxu0 0.0
    %679 = vmatpush1.msra.mxu0 0.0
    %680 = vmatprep.subr.mxu0 0.0
    %681 = vmatpush1.msra.mxu0 0.0
    %682 = vmatprep.subr.mxu0 0.0
    %683 = vmatpush1.msra.mxu0 0.0
    %684 = vmatprep.subr.mxu0 0.0
    %685 = vmatpush1.msra.mxu0 0.0
    %686 = vmatprep.subr.mxu0 0.0
    %687 = vmatpush1.msra.mxu0 0.0
    %688 = vmatprep.subr.mxu0 0.0
    %689 = vmatpush1.msra.mxu0 0.0
    %690 = vmatprep.subr.mxu0 0.0
    %691 = vmatpush1.msra.mxu0 0.0
    %692 = vmatprep.subr.mxu0 0.0
    %693 = vmatpush1.msra.mxu0 0.0
    %694 = vmatprep.subr.mxu0 0.0
    %695 = vmatpush1.msra.mxu0 %v73
    %696 = vmatprep.subr.mxu0 0.0
    %697 = vmatpush1.msra.mxu0 %v72
    %698 = vmatprep.subr.mxu0 0.0
    %699 = vmatpush1.msra.mxu0 %v71
    %700 = vmatprep.subr.mxu0 0.0
    %701 = vmatpush1.msra.mxu0 %v70
    %702 = vmatprep.subr.mxu0 0.0
    %703 = vmatpush2.msra.mxu0 0.0
    %704 = vmatprep.subr.mxu0 0.0
    %705 = vmatpush2.msra.mxu0 0.0
    %706 = vmatprep.subr.mxu0 0.0
    %707 = vmatpush2.msra.mxu0 0.0
    %708 = vmatprep.subr.mxu0 0.0
    %709 = vmatpush2.msra.mxu0 0.0
    %710 = vmatprep.subr.mxu0 0.0
    %711 = vmatpush2.msra.mxu0 0.0
    %712 = vmatprep.subr.mxu0 0.0
    %713 = vmatpush2.msra.mxu0 0.0
    %714 = vmatprep.subr.mxu0 0.0
    %715 = vmatpush2.msra.mxu0 0.0
    %716 = vmatprep.subr.mxu0 0.0
    %717 = vmatpush2.msra.mxu0 0.0
    %718 = vmatprep.subr.mxu0 0.0
    %719 = vmatpush2.msra.mxu0 0.0
    %720 = vmatprep.subr.mxu0 0.0
    %721 = vmatpush2.msra.mxu0 0.0
    %722 = vmatprep.subr.mxu0 0.0
    %723 = vmatpush2.msra.mxu0 0.0
    %724 = vmatprep.subr.mxu0 0.0
    %725 = vmatpush2.msra.mxu0 0.0
    %726 = vmatprep.subr.mxu0 0.0
    %727 = vmatpush2.msra.mxu0 0.0
    %728 = vmatprep.subr.mxu0 0.0
    %729 = vmatpush2.msra.mxu0 0.0
    %730 = vmatprep.subr.mxu0 0.0
    %731 = vmatpush2.msra.mxu0 0.0
    %732 = vmatprep.subr.mxu0 0.0
    %733 = vmatpush2.msra.mxu0 0.0
    %734 = vmatprep.mubr.f32.mxu0 0.0
    %735 = vmatmul.mubr.f32.gmra.mxu0 %v668
    %v736 = vpop.f32.mrf.mxu0
    %v737 = vadd.f32 0.0, %v736
    %v738 = vpop.f32.mrf.mxu0
    %739 = vdwg.mxu0
    %v740 = vadd.f32 %v665, %v737
    %v741 = vxor.u32 %v740, 2147483648
    %v742 = vmul.f32 %v741, 1.442695
    %v743 = vpow.pop %v742
    %v744 = vadd.f32 %v743, 1.0
    %v745 = vrcp.pop %v744
    %v746 = vmul.f32 1.0, %v745
    %v747 = vtanh.pop %v740
    %v748 = vld [vmem:[#allocation3] sm:$0x3]
    %750 = vrot.lane.b32.xlu0 %v748, 32
    %v751 = vpop.permute.xlu0 %750
    %v753 = vmul.f32 %v746, %v751
    %755 = vrot.lane.b32.xlu0 %v747, 64
    %v756 = vpop.permute.xlu0 %755
    %v758 = vmul.f32 %v746, %v756
    %760 = vrot.lane.b32.xlu0 %v758, 32
    %v761 = vpop.permute.xlu0 %760
    %v763 = vadd.f32 %v753, %v761
    %v764 = vtanh.pop %v763
    %766 = vrot.lane.b32.xlu0 %v764, 64
    %v767 = vpop.permute.xlu0 %766
    %v769 = vmul.f32 %v746, %v767
    %771 = vrot.lane.b32.xlu0 %v763, 96
    %v772 = vpop.permute.xlu0 %771
    %774 = vst.msk [vmem:[#allocation3] sm:$0x3] %vm184, %v772
    %776 = vrot.lane.b32.xlu0 %v769, 32
    %v777 = vpop.permute.xlu0 %776
    %779 = vst.msk [vmem:[#allocation2] sm:$0x3] %vm184, %v777
    %s780 = scalar_lea.vmem [#allocation10], 10
    %781 = vst.msk [vmem:[%s780] sm:$0x3] %vm184, %v777
    %s782 = scalar_lea.vmem [#allocation4], 12
    %v783 = vld [vmem:[%s782] sm:$0x3]
    %v784 = vld [vmem:[#allocation2] sm:$0x3]
    %v786 = vsel %vm76, %v784, 0
    %788 = vmatprep.subr.mxu0 0.0
    %789 = vmatpush1.msra.mxu0 0.0
    %790 = vmatprep.subr.mxu0 0.0
    %791 = vmatpush1.msra.mxu0 0.0
    %792 = vmatprep.subr.mxu0 0.0
    %793 = vmatpush1.msra.mxu0 0.0
    %794 = vmatprep.subr.mxu0 0.0
    %795 = vmatpush1.msra.mxu0 0.0
    %796 = vmatprep.subr.mxu0 0.0
    %797 = vmatpush1.msra.mxu0 0.0
    %798 = vmatprep.subr.mxu0 0.0
    %799 = vmatpush1.msra.mxu0 0.0
    %800 = vmatprep.subr.mxu0 0.0
    %801 = vmatpush1.msra.mxu0 0.0
    %802 = vmatprep.subr.mxu0 0.0
    %803 = vmatpush1.msra.mxu0 0.0
    %804 = vmatprep.subr.mxu0 0.0
    %805 = vmatpush1.msra.mxu0 0.0
    %806 = vmatprep.subr.mxu0 0.0
    %807 = vmatpush1.msra.mxu0 0.0
    %808 = vmatprep.subr.mxu0 0.0
    %809 = vmatpush1.msra.mxu0 0.0
    %810 = vmatprep.subr.mxu0 0.0
    %811 = vmatpush1.msra.mxu0 0.0
    %812 = vmatprep.subr.mxu0 0.0
    %813 = vmatpush1.msra.mxu0 %v73
    %814 = vmatprep.subr.mxu0 0.0
    %815 = vmatpush1.msra.mxu0 %v72
    %816 = vmatprep.subr.mxu0 0.0
    %817 = vmatpush1.msra.mxu0 %v71
    %818 = vmatprep.subr.mxu0 0.0
    %819 = vmatpush1.msra.mxu0 %v70
    %820 = vmatprep.subr.mxu0 0.0
    %821 = vmatpush2.msra.mxu0 0.0
    %822 = vmatprep.subr.mxu0 0.0
    %823 = vmatpush2.msra.mxu0 0.0
    %824 = vmatprep.subr.mxu0 0.0
    %825 = vmatpush2.msra.mxu0 0.0
    %826 = vmatprep.subr.mxu0 0.0
    %827 = vmatpush2.msra.mxu0 0.0
    %828 = vmatprep.subr.mxu0 0.0
    %829 = vmatpush2.msra.mxu0 0.0
    %830 = vmatprep.subr.mxu0 0.0
    %831 = vmatpush2.msra.mxu0 0.0
    %832 = vmatprep.subr.mxu0 0.0
    %833 = vmatpush2.msra.mxu0 0.0
    %834 = vmatprep.subr.mxu0 0.0
    %835 = vmatpush2.msra.mxu0 0.0
    %836 = vmatprep.subr.mxu0 0.0
    %837 = vmatpush2.msra.mxu0 0.0
    %838 = vmatprep.subr.mxu0 0.0
    %839 = vmatpush2.msra.mxu0 0.0
    %840 = vmatprep.subr.mxu0 0.0
    %841 = vmatpush2.msra.mxu0 0.0
    %842 = vmatprep.subr.mxu0 0.0
    %843 = vmatpush2.msra.mxu0 0.0
    %844 = vmatprep.subr.mxu0 0.0
    %845 = vmatpush2.msra.mxu0 0.0
    %846 = vmatprep.subr.mxu0 0.0
    %847 = vmatpush2.msra.mxu0 0.0
    %848 = vmatprep.subr.mxu0 0.0
    %849 = vmatpush2.msra.mxu0 0.0
    %850 = vmatprep.subr.mxu0 0.0
    %851 = vmatpush2.msra.mxu0 0.0
    %852 = vmatprep.mubr.f32.mxu0 0.0
    %853 = vmatmul.mubr.f32.gmra.mxu0 %v786
    %v854 = vpop.f32.mrf.mxu0
    %v855 = vadd.f32 0.0, %v854
    %v856 = vpop.f32.mrf.mxu0
    %857 = vdwg.mxu0
    %v858 = vadd.f32 %v783, %v855
    %v859 = vxor.u32 %v858, 2147483648
    %v860 = vmul.f32 %v859, 1.442695
    %v861 = vpow.pop %v860
    %v862 = vadd.f32 %v861, 1.0
    %v863 = vrcp.pop %v862
    %v864 = vmul.f32 1.0, %v863
    %v865 = vtanh.pop %v858
    %v866 = vld [vmem:[#allocation3] sm:$0x3]
    %868 = vrot.lane.b32.xlu0 %v866, 32
    %v869 = vpop.permute.xlu0 %868
    %v871 = vmul.f32 %v864, %v869
    %873 = vrot.lane.b32.xlu0 %v865, 64
    %v874 = vpop.permute.xlu0 %873
    %v876 = vmul.f32 %v864, %v874
    %878 = vrot.lane.b32.xlu0 %v876, 32
    %v879 = vpop.permute.xlu0 %878
    %v881 = vadd.f32 %v871, %v879
    %v882 = vtanh.pop %v881
    %884 = vrot.lane.b32.xlu0 %v882, 64
    %v885 = vpop.permute.xlu0 %884
    %v887 = vmul.f32 %v864, %v885
    %889 = vrot.lane.b32.xlu0 %v881, 96
    %v890 = vpop.permute.xlu0 %889
    %892 = vst.msk [vmem:[#allocation3] sm:$0x3] %vm184, %v890
    %894 = vrot.lane.b32.xlu0 %v887, 32
    %v895 = vpop.permute.xlu0 %894
    %897 = vst.msk [vmem:[#allocation2] sm:$0x3] %vm184, %v895
    %s898 = scalar_lea.vmem [#allocation10], 12
    %899 = vst.msk [vmem:[%s898] sm:$0x3] %vm184, %v895
    %s900 = scalar_lea.vmem [#allocation4], 14
    %v901 = vld [vmem:[%s900] sm:$0x3]
    %v902 = vld [vmem:[#allocation2] sm:$0x3]
    %v904 = vsel %vm76, %v902, 0
    %906 = vmatprep.subr.mxu0 0.0
    %907 = vmatpush1.msra.mxu0 0.0
    %908 = vmatprep.subr.mxu0 0.0
    %909 = vmatpush1.msra.mxu0 0.0
    %910 = vmatprep.subr.mxu0 0.0
    %911 = vmatpush1.msra.mxu0 0.0
    %912 = vmatprep.subr.mxu0 0.0
    %913 = vmatpush1.msra.mxu0 0.0
    %914 = vmatprep.subr.mxu0 0.0
    %915 = vmatpush1.msra.mxu0 0.0
    %916 = vmatprep.subr.mxu0 0.0
    %917 = vmatpush1.msra.mxu0 0.0
    %918 = vmatprep.subr.mxu0 0.0
    %919 = vmatpush1.msra.mxu0 0.0
    %920 = vmatprep.subr.mxu0 0.0
    %921 = vmatpush1.msra.mxu0 0.0
    %922 = vmatprep.subr.mxu0 0.0
    %923 = vmatpush1.msra.mxu0 0.0
    %924 = vmatprep.subr.mxu0 0.0
    %925 = vmatpush1.msra.mxu0 0.0
    %926 = vmatprep.subr.mxu0 0.0
    %927 = vmatpush1.msra.mxu0 0.0
    %928 = vmatprep.subr.mxu0 0.0
    %929 = vmatpush1.msra.mxu0 0.0
    %930 = vmatprep.subr.mxu0 0.0
    %931 = vmatpush1.msra.mxu0 %v73
    %932 = vmatprep.subr.mxu0 0.0
    %933 = vmatpush1.msra.mxu0 %v72
    %934 = vmatprep.subr.mxu0 0.0
    %935 = vmatpush1.msra.mxu0 %v71
    %936 = vmatprep.subr.mxu0 0.0
    %937 = vmatpush1.msra.mxu0 %v70
    %938 = vmatprep.subr.mxu0 0.0
    %939 = vmatpush2.msra.mxu0 0.0
    %940 = vmatprep.subr.mxu0 0.0
    %941 = vmatpush2.msra.mxu0 0.0
    %942 = vmatprep.subr.mxu0 0.0
    %943 = vmatpush2.msra.mxu0 0.0
    %944 = vmatprep.subr.mxu0 0.0
    %945 = vmatpush2.msra.mxu0 0.0
    %946 = vmatprep.subr.mxu0 0.0
    %947 = vmatpush2.msra.mxu0 0.0
    %948 = vmatprep.subr.mxu0 0.0
    %949 = vmatpush2.msra.mxu0 0.0
    %950 = vmatprep.subr.mxu0 0.0
    %951 = vmatpush2.msra.mxu0 0.0
    %952 = vmatprep.subr.mxu0 0.0
    %953 = vmatpush2.msra.mxu0 0.0
    %954 = vmatprep.subr.mxu0 0.0
    %955 = vmatpush2.msra.mxu0 0.0
    %956 = vmatprep.subr.mxu0 0.0
    %957 = vmatpush2.msra.mxu0 0.0
    %958 = vmatprep.subr.mxu0 0.0
    %959 = vmatpush2.msra.mxu0 0.0
    %960 = vmatprep.subr.mxu0 0.0
    %961 = vmatpush2.msra.mxu0 0.0
    %962 = vmatprep.subr.mxu0 0.0
    %963 = vmatpush2.msra.mxu0 0.0
    %964 = vmatprep.subr.mxu0 0.0
    %965 = vmatpush2.msra.mxu0 0.0
    %966 = vmatprep.subr.mxu0 0.0
    %967 = vmatpush2.msra.mxu0 0.0
    %968 = vmatprep.subr.mxu0 0.0
    %969 = vmatpush2.msra.mxu0 0.0
    %970 = vmatprep.mubr.f32.mxu0 0.0
    %971 = vmatmul.mubr.f32.gmra.mxu0 %v904
    %v972 = vpop.f32.mrf.mxu0
    %v973 = vadd.f32 0.0, %v972
    %v974 = vpop.f32.mrf.mxu0
    %975 = vdwg.mxu0
    %v976 = vadd.f32 %v901, %v973
    %v977 = vxor.u32 %v976, 2147483648
    %v978 = vmul.f32 %v977, 1.442695
    %v979 = vpow.pop %v978
    %v980 = vadd.f32 %v979, 1.0
    %v981 = vrcp.pop %v980
    %v982 = vmul.f32 1.0, %v981
    %v983 = vtanh.pop %v976
    %v984 = vld [vmem:[#allocation3] sm:$0x3]
    %986 = vrot.lane.b32.xlu0 %v984, 32
    %v987 = vpop.permute.xlu0 %986
    %v989 = vmul.f32 %v982, %v987
    %991 = vrot.lane.b32.xlu0 %v983, 64
    %v992 = vpop.permute.xlu0 %991
    %v994 = vmul.f32 %v982, %v992
    %996 = vrot.lane.b32.xlu0 %v994, 32
    %v997 = vpop.permute.xlu0 %996
    %v999 = vadd.f32 %v989, %v997
    %v1000 = vtanh.pop %v999
    %1002 = vrot.lane.b32.xlu0 %v1000, 64
    %v1003 = vpop.permute.xlu0 %1002
    %v1005 = vmul.f32 %v982, %v1003
    %1007 = vrot.lane.b32.xlu0 %v999, 96
    %v1008 = vpop.permute.xlu0 %1007
    %1010 = vst.msk [vmem:[#allocation3] sm:$0x3] %vm184, %v1008
    %1012 = vrot.lane.b32.xlu0 %v1005, 32
    %v1013 = vpop.permute.xlu0 %1012
    %1015 = vst.msk [vmem:[#allocation2] sm:$0x3] %vm184, %v1013
    %s1016 = scalar_lea.vmem [#allocation10], 14
    %1017 = vst.msk [vmem:[%s1016] sm:$0x3] %vm184, %v1013
    // Predicated region
    $region34: #{tpu_custom_call.1} parent=1 // pred_check
      %p1018 = pneg %p61
    $region35: #{tpu_custom_call.1} parent=1 // pred_check_branch
      %1020 = sbr.rel (%p1018) target = $region37
    $region36: #{tpu_custom_call.1} parent=1 // pred_region
      %v1021 = vld [vmem:[#allocation2] sm:$0x3]
      %1022 = vst.msk [vmem:[#allocation11] sm:$0x3] %vm184, %v1021
      %v1023 = vld [vmem:[#allocation3] sm:$0x3]
      %1024 = vst.msk [vmem:[#allocation13] sm:$0x3] %vm184, %v1023
    $region37: #{tpu_custom_call.1} parent=1 // pred_fallthru
      _
    // Predicated region
    $region38: #{tpu_custom_call.1} parent=1 // pred_check
      _
    $region39: #{tpu_custom_call.1} parent=1 // pred_check_branch
      %1026 = sbr.rel (0) target = $region41
    $region40: #{tpu_custom_call.1} parent=1 // pred_region
      %s1028 = ssub.s32 256, 256
      %1029 = vsyncadd [#allocation6], %s1028
      %s1030 = sshll.u32 [#allocation10], 4
      %s1031 = int_to_ptr.vmem [resolvable:$true] %s1030
      %1036 = dma.vmem_to_hbm [thread:$0]  %s1031, 256, %s4, [#allocation6], 32, 32, 2
    $region41: #{tpu_custom_call.1} parent=1 // pred_fallthru
      _
    // Predicated region
    $region42: #{tpu_custom_call.1} parent=1 // pred_check
      _
    $region43: #{tpu_custom_call.1} parent=1 // pred_check_branch
      %1038 = sbr.rel (0) target = $region45
    $region44: #{tpu_custom_call.1} parent=1 // pred_region
      %s1040 = ssub.s32 32, 32
      %1041 = vsyncadd [#allocation12], %s1040
      %s1043 = sshll.u32 [#allocation11], 4
      %s1044 = int_to_ptr.vmem [resolvable:$true] %s1043
      %1046 = dma.vmem_to_hbm [thread:$0]  %s1044, 32, %s5, [#allocation12]
    $region45: #{tpu_custom_call.1} parent=1 // pred_fallthru
      _
    // Predicated region
    $region46: #{tpu_custom_call.1} parent=1 // pred_check
      _
    $region47: #{tpu_custom_call.1} parent=1 // pred_check_branch
      %1048 = sbr.rel (0) target = $region49
    $region48: #{tpu_custom_call.1} parent=1 // pred_region
      %s1050 = ssub.s32 32, 32
      %1051 = vsyncadd [#allocation12], %s1050
      %s1053 = sshll.u32 [#allocation13], 4
      %s1054 = int_to_ptr.vmem [resolvable:$true] %s1053
      %1056 = dma.vmem_to_hbm [thread:$0]  %s1054, 32, %s6, [#allocation12]
    $region49: #{tpu_custom_call.1} parent=1 // pred_fallthru
      _
    // Predicated region
    $region50: #{tpu_custom_call.1} parent=1 // pred_check
      _
    $region51: #{tpu_custom_call.1} parent=1 // pred_check_branch
      %1058 = sbr.rel (0) target = $region53
    $region52: #{tpu_custom_call.1} parent=1 // pred_region
      %1059 = dma.done [#allocation6], 256
    $region53: #{tpu_custom_call.1} parent=1 // pred_fallthru
      _
    // Predicated region
    $region54: #{tpu_custom_call.1} parent=1 // pred_check
      _
    $region55: #{tpu_custom_call.1} parent=1 // pred_check_branch
      %1061 = sbr.rel (0) target = $region57
    $region56: #{tpu_custom_call.1} parent=1 // pred_region
      %1062 = dma.done [#allocation12], 32
    $region57: #{tpu_custom_call.1} parent=1 // pred_fallthru
      _
    // Predicated region
    $region58: #{tpu_custom_call.1} parent=1 // pred_check
      _
    $region59: #{tpu_custom_call.1} parent=1 // pred_check_branch
      %1064 = sbr.rel (0) target = $region61
    $region60: #{tpu_custom_call.1} parent=1 // pred_region
      %1065 = dma.done [#allocation12], 32
    $region61: #{tpu_custom_call.1} parent=1 // pred_fallthru
      _
    %1066 = vsyncpa [#allocation5], 1
    %1067 = vsyncpa [#allocation8], 1
    %1068 = vsyncpa [#allocation6], 1
    %1069 = vsyncpa [#allocation12], 1

</llo_original>
